<compile_context>
chip_gen: v5e
topology: v5e:2x2
jax: 0.10.0
libtpu: 0.0.40
codegen_flags: <defaults>
</compile_context>

<pallas_src>
import math

import jax
import jax.numpy as jnp
from jax.experimental import pallas as pl
from jax.experimental.pallas import tpu as pltpu

# ---------------------------------------------------------------- config ----
N_NODES = 16
N_OBS = 8
N_FIXED_FEATS = 10          # fixed graph node features
POS_ENC_DIM = 4             # args.pos_enc_dim
ENCODER_DIM = 32            # args.encoder_dim_transformer
NUM_HEADS = 4               # args.num_heads
HEAD_DIM = ENCODER_DIM // NUM_HEADS
FFN_DIM = 2 * ENCODER_DIM
N_LAYERS = 2                # args.n_layers_transformers
USE_GRAPH_INPUT = True      # args.use_graph_input
LN_EPS = 1e-5
NEG_INF = -1e9

IN_DIM = N_OBS + (N_FIXED_FEATS if USE_GRAPH_INPUT else 0)

HN = NUM_HEADS * N_NODES    # 64: all heads' score columns side by side
QKV_W = 3 * ENCODER_DIM     # 96
QKV_PAD = 128               # pad fused QKV output to a full lane tile

MAX_BB = 256                # batch elements per grid step (amortizes step cost)


# --------------------------------------------------------------- helpers ----
def _layer_norm(x, g, b):
    mu = jnp.mean(x, axis=-1, keepdims=True)
    var = jnp.mean((x - mu) ** 2, axis=-1, keepdims=True)
    return (x - mu) * jax.lax.rsqrt(var + LN_EPS) * g + b


def _chip_kind():
    try:
        return jax.devices()[0].device_kind.lower()
    except Exception:
        return ""


def _num_tensorcores_per_chip():
    # only v7x has 2 TensorCores per chip; v5e/v6e are single-TC
    return 2 if "v7" in _chip_kind() else 1


def _vmem_limit_bytes():
    # v7x has only 64 MiB VMEM per TC; leave headroom there
    return (48 if "v7" in _chip_kind() else 64) * 1024 * 1024


# ----------------------------------------------------------- fused kernel ---
def fused_transformer_kernel(
        x_ref, nc_ref, maskc_ref, bsum_ref, kvmask_ref, wobs_ref,
        wqkv_ref, bqkv_ref, wo_ref, bo_ref,
        w1_ref, b1_ref, w2_ref, b2_ref,
        g1_ref, be1_ref, g2_ref, be2_ref,
        out_ref):
    """Encoder + N_LAYERS graph-transformer layers for BB batch elements."""
    rows = x_ref.shape[0]                       # BB * N_NODES (static)
    bb = rows // N_NODES
    f32 = jnp.float32
    bf16 = jnp.bfloat16

    # ---- encoder: h = x_obs @ W_obs + (fixed-feat + Laplacian-PE) constant
    h = jnp.dot(x_ref[...], wobs_ref[...], preferred_element_type=f32)
    h = (h.reshape(bb, N_NODES, ENCODER_DIM)
         + nc_ref[...][None]).reshape(rows, ENCODER_DIM)

    # hoisted loop-invariant broadcasts (JAX does not CSE broadcast_in_dim)
    mask_b = jnp.broadcast_to(maskc_ref[...][None],
                              (bb, N_NODES, HN))                 # additive mask
    kvm_b = jnp.broadcast_to(kvmask_ref[...][None],
                             (bb, HN, ENCODER_DIM))              # head blocks
    bsum = bsum_ref[...]                                         # (HN, HN)

    for l in range(N_LAYERS):                                    # static unroll
        h_bf = h.astype(bf16)

        # ---- fused QKV projection: one matmul, one bias add, one cast
        qkv = (jnp.dot(h_bf, wqkv_ref[l], preferred_element_type=f32)
               + bqkv_ref[l]).astype(bf16)                       # (rows, 128)
        q3 = qkv[:, 0:ENCODER_DIM].reshape(bb, N_NODES, ENCODER_DIM)
        k3 = qkv[:, ENCODER_DIM:2 * ENCODER_DIM].reshape(bb, N_NODES,
                                                         ENCODER_DIM)
        v3 = qkv[:, 2 * ENCODER_DIM:QKV_W].reshape(bb, N_NODES, ENCODER_DIM)

        # ---- head-batched attention via block-masked K/V replicas:
        # k_blk[b, h*N+m, :] keeps only head-h feature columns of k[b, m, :],
        # so one batched einsum yields all heads' scores side by side.
        k_blk = jnp.concatenate([k3] * NUM_HEADS, axis=1) * kvm_b   # (bb,HN,D)
        v_blk = jnp.concatenate([v3] * NUM_HEADS, axis=1) * kvm_b

        s3 = jnp.einsum('bnd,bmd->bnm', q3, k_blk,
                        preferred_element_type=f32)              # (bb, N, HN)
        s2 = (s3 + mask_b).reshape(rows, HN)
        # per-row max over ALL heads: a valid (mathematically identical)
        # softmax shift; every node has a self-loop so the max is finite.
        s2 = s2 - jnp.max(s2, axis=-1, keepdims=True)
        e2 = jnp.exp(s2)                                         # (rows, HN)
        # per-head denominators broadcast back over HN lanes (constant matmul)
        denom = jnp.dot(e2, bsum, preferred_element_type=f32)
        p3 = (e2 * pl.reciprocal(denom, approx=True)
              ).reshape(bb, N_NODES, HN).astype(bf16)
        o3 = jnp.einsum('bnm,bmd->bnd', p3, v_blk,
                        preferred_element_type=f32)              # heads concat

        # ---- fused O projection + residual + LayerNorm
        attn = jnp.dot(o3.reshape(rows, ENCODER_DIM).astype(bf16), wo_ref[l],
                       preferred_element_type=f32)
        h1 = _layer_norm(h + attn + bo_ref[l], g1_ref[l], be1_ref[l])

        # ---- FFN + residual + LayerNorm
        f = jnp.dot(h1.astype(bf16), w1_ref[l],
                    preferred_element_type=f32) + b1_ref[l]
        f = jnp.maximum(f, 0.0)
        f = jnp.dot(f.astype(bf16), w2_ref[l],
                    preferred_element_type=f32) + b2_ref[l]
        h = _layer_norm(h1 + f, g2_ref[l], be2_ref[l])

    out_ref[...] = h.reshape(bb, N_NODES, ENCODER_DIM).astype(out_ref.dtype)


# --------------------------------------------------------- pallas wrapper ---
def _tile_batch(b_eff):
    """Choose (grid, batch-tile, padded batch)."""
    g = -(-b_eff // MAX_BB)
    # 2-way split only pays off on 2-TensorCore chips (v7x); on single-TC
    # v5e/v6e it just doubles the per-step overhead share.
    if _num_tensorcores_per_chip() >= 2 and g == 1 and b_eff >= 16:
        g = 2
    bb = -(-b_eff // g)
    return g, bb, g * bb


def _run_fused(x_rows, node_const, kp, g, bb):
    rows = bb * N_NODES
    b_pad = g * bb

    def const_spec(shape):
        return pl.BlockSpec(shape, lambda i, _n=len(shape): (0,) * _n)

    in_specs = [
        pl.BlockSpec((rows, N_OBS), lambda i: (i, 0)),           # x (bf16)
        const_spec((N_NODES, ENCODER_DIM)),                      # node const
        const_spec((N_NODES, HN)),                               # additive mask
        const_spec((HN, HN)),                                    # block-sum
        const_spec((HN, ENCODER_DIM)),                           # head blockmask
        const_spec((N_OBS, ENCODER_DIM)),                        # W_obs
        const_spec(kp["wqkv"].shape), const_spec(kp["bqkv"].shape),
        const_spec(kp["wo"].shape), const_spec(kp["bo"].shape),
        const_spec(kp["w1"].shape), const_spec(kp["b1"].shape),
        const_spec(kp["w2"].shape), const_spec(kp["b2"].shape),
        const_spec(kp["g1"].shape), const_spec(kp["be1"].shape),
        const_spec(kp["g2"].shape), const_spec(kp["be2"].shape),
    ]
    return pl.pallas_call(
        fused_transformer_kernel,
        out_shape=jax.ShapeDtypeStruct((b_pad, N_NODES, ENCODER_DIM),
                                       jnp.bfloat16),
        grid=(g,),
        in_specs=in_specs,
        out_specs=pl.BlockSpec((bb, N_NODES, ENCODER_DIM),
                               lambda i: (i, 0, 0)),
        compiler_params=pltpu.CompilerParams(
            dimension_semantics=("parallel",),
            vmem_limit_bytes=_vmem_limit_bytes()),
    )(x_rows, node_const, kp["mask_cat"], kp["bsum"], kp["kvmask"],
      kp["w_obs"], kp["wqkv"], kp["bqkv"], kp["wo"], kp["bo"],
      kp["w1"], kp["b1"], kp["w2"], kp["b2"],
      kp["g1"], kp["be1"], kp["g2"], kp["be2"])


# ------------------------------------------------------------ param prep ----
def init_params_and_constants():
    """Deterministic synthetic parameters + graph constants (master f32,
    PyTorch (out, in) weight layout)."""
    key = jax.random.PRNGKey(1)
    ks = iter(jax.random.split(key, 64))

    def lin(kout, kin, scale=0.1):
        return (scale * jax.random.normal(next(ks), (kout, kin), jnp.float32),
                scale * jax.random.normal(next(ks), (1, kout), jnp.float32))

    params = {}
    params["w_in"], params["b_in"] = lin(ENCODER_DIM, IN_DIM)
    params["w_pe"], params["b_pe"] = lin(ENCODER_DIM, POS_ENC_DIM)

    layers = []
    for _ in range(N_LAYERS):
        lp = {}
        lp["wq"], lp["bq"] = lin(ENCODER_DIM, ENCODER_DIM)
        lp["wk"], lp["bk"] = lin(ENCODER_DIM, ENCODER_DIM)
        lp["wv"], lp["bv"] = lin(ENCODER_DIM, ENCODER_DIM)
        lp["wo"], lp["bo"] = lin(ENCODER_DIM, ENCODER_DIM)
        lp["w1"], lp["b1"] = lin(FFN_DIM, ENCODER_DIM)
        lp["w2"], lp["b2"] = lin(ENCODER_DIM, FFN_DIM)
        lp["g1"] = jnp.ones((1, ENCODER_DIM), jnp.float32)
        lp["be1"] = jnp.zeros((1, ENCODER_DIM), jnp.float32)
        lp["g2"] = jnp.ones((1, ENCODER_DIM), jnp.float32)
        lp["be2"] = jnp.zeros((1, ENCODER_DIM), jnp.float32)
        layers.append(lp)
    params["layers"] = layers

    # graph constants (synthetic, deterministic): ring adjacency + extras
    ckey = jax.random.PRNGKey(2)
    c1, c2 = jax.random.split(ckey)
    idx = jnp.arange(N_NODES)
    adj = jnp.zeros((N_NODES, N_NODES), jnp.float32)
    adj = adj.at[idx, (idx + 1) % N_NODES].set(1.0)
    adj = adj.at[(idx + 1) % N_NODES, idx].set(1.0)
    adj = adj.at[idx, (idx + 4) % N_NODES].set(1.0)
    adj = adj.at[(idx + 4) % N_NODES, idx].set(1.0)
    adj_mask = jnp.clip(adj + jnp.eye(N_NODES, dtype=jnp.float32), 0.0, 1.0)

    constants = {
        "adj_mask": adj_mask,
        "fixed_node_features": jax.random.normal(
            c1, (N_NODES, N_FIXED_FEATS), jnp.float32),
        "EigVec": jax.random.normal(
            c2, (N_NODES, POS_ENC_DIM), jnp.float32),
    }
    return params, constants


def pack_kernel_params(params, constants):
    """One-time host-side packing: transpose to (in,out), fuse Q|K|V (padded to
    128 lanes, 1/sqrt(hd) folded into Q), stack over layers, bf16 matmul
    weights, additive adjacency mask tiled over heads, head block-mask and
    block-sum constants for head-batched attention."""
    bf = jnp.bfloat16
    scale = 1.0 / math.sqrt(HEAD_DIM)

    w_in_t = params["w_in"].T                        # (IN_DIM, D)
    w_obs = w_in_t[:N_OBS].astype(bf)                # (N_OBS, D)
    w_fixed = w_in_t[N_OBS:]                         # (N_FIXED, D), f32
    # constant (batch-independent) part of the encoder output, per node
    nc_fixed = constants["fixed_node_features"] @ w_fixed + params["b_in"]

    def stack(key):
        return jnp.stack([lp[key] for lp in params["layers"]], axis=0)

    wqkv, bqkv = [], []
    for lp in params["layers"]:
        w = jnp.concatenate([lp["wq"].T * scale, lp["wk"].T, lp["wv"].T],
                            axis=1)                              # (D, 96)
        b = jnp.concatenate([lp["bq"] * scale, lp["bk"], lp["bv"]],
                            axis=1)                              # (1, 96)
        wqkv.append(jnp.pad(w, ((0, 0), (0, QKV_PAD - QKV_W))))
        bqkv.append(jnp.pad(b, ((0, 0), (0, QKV_PAD - QKV_W))))
    wqkv = jnp.stack(wqkv, 0).astype(bf)             # (L, D, 128)
    bqkv = jnp.stack(bqkv, 0)                        # (L, 1, 128) f32

    # adjacency -> additive mask, tiled over heads along the score lane dim
    mask_add = jnp.where(constants["adj_mask"] > 0.5, 0.0,
                         NEG_INF).astype(jnp.float32)            # (N, N)
    mask_cat = jnp.tile(mask_add, (1, NUM_HEADS))                # (N, HN)

    head_of_row = jnp.repeat(jnp.arange(NUM_HEADS), N_NODES)     # (HN,)
    head_of_col = jnp.repeat(jnp.arange(NUM_HEADS), HEAD_DIM)    # (D,)
    kvmask = (head_of_row[:, None] == head_of_col[None, :]).astype(bf)
    bsum = (head_of_row[:, None] == head_of_row[None, :]).astype(jnp.float32)

    kp = dict(
        w_obs=w_obs,
        nc_fixed=nc_fixed,
        w_pe_t=params["w_pe"].T,                     # (POS_ENC_DIM, D) f32
        b_pe=params["b_pe"],
        mask_cat=mask_cat, bsum=bsum, kvmask=kvmask,
        wqkv=wqkv, bqkv=bqkv,
        wo=jnp.stack([lp["wo"].T for lp in params["layers"]], 0).astype(bf),
        bo=stack("bo"),
        w1=jnp.stack([lp["w1"].T for lp in params["layers"]], 0).astype(bf),
        b1=stack("b1"),
        w2=jnp.stack([lp["w2"].T for lp in params["layers"]], 0).astype(bf),
        b2=stack("b2"),
        g1=stack("g1"), be1=stack("be1"),
        g2=stack("g2"), be2=stack("be2"),
    )
    return kp


# ------------------------------------------------------------- the module ---
def transformer_forward(x, constants, kparams, sign_key):
    """Mirrors Transformer.forward for 2-D (B*N, n_obs) or 4-D (B,T,N,n_obs)."""
    orig_ndim = x.ndim
    if orig_ndim == 2:
        b_eff = x.shape[0] // N_NODES
        xb = x.reshape(b_eff, N_NODES, -1)
    elif orig_ndim == 4:
        bsz, n_t = x.shape[0], x.shape[1]
        b_eff = bsz * n_t
        xb = x.reshape(b_eff, N_NODES, x.shape[3])
    else:
        raise ValueError("x must be 2-D or 4-D")

    # random sign flip of the Laplacian PE (deterministic key here)
    u = jax.random.uniform(sign_key, (POS_ENC_DIM,))
    sign = jnp.where(u >= 0.5, 1.0, -1.0).astype(jnp.float32)
    eig_flipped = constants["EigVec"] * sign[None, :]
    # per-node constant encoder term (fixed features + PE), folded on host
    node_const = (kparams["nc_fixed"]
                  + eig_flipped @ kparams["w_pe_t"]
                  + kparams["b_pe"]).astype(jnp.float32)         # (N, D)

    g, bb, b_pad = _tile_batch(b_eff)
    # pre-cast x to bf16: halves the x HBM stream and drops the in-kernel cast
    x_rows = xb.reshape(b_eff * N_NODES, N_OBS).astype(jnp.bfloat16)
    if b_pad != b_eff:
        x_rows = jnp.pad(x_rows, ((0, (b_pad - b_eff) * N_NODES), (0, 0)))

    h = _run_fused(x_rows, node_const, kparams, g, bb)      # (b_pad, N, D) bf16
    h = h[:b_eff].astype(jnp.float32)                       # match module dtype

    if orig_ndim == 2:
        return h.reshape(b_eff * N_NODES, ENCODER_DIM)
    return h.reshape(bsz, n_t, N_NODES, ENCODER_DIM)


# ------------------------------------------------------------------- main ---
if __name__ == "__main__":
    params, constants = init_params_and_constants()
    kparams = pack_kernel_params(params, constants)

    fwd = jax.jit(transformer_forward)

    key = jax.random.PRNGKey(0)
    k2d, k4d, ksign = jax.random.split(key, 3)

    # 2-D path: (batch * n_nodes, n_obs)
    B = 2
    x2d = jax.random.normal(k2d, (B * N_NODES, N_OBS), jnp.float32)
    out2d = jax.block_until_ready(fwd(x2d, constants, kparams, ksign))
    assert out2d.shape == (B * N_NODES, ENCODER_DIM)
    assert bool(jnp.all(jnp.isfinite(out2d)))

    # 4-D path: (batch, timesteps, n_nodes, n_obs)
    T = 3
    x4d = jax.random.normal(k4d, (B, T, N_NODES, N_OBS), jnp.float32)
    out4d = jax.block_until_ready(fwd(x4d, constants, kparams, ksign))
    assert out4d.shape == (B, T, N_NODES, ENCODER_DIM)
    assert bool(jnp.all(jnp.isfinite(out4d)))

    print("KERNEL_OK")
</pallas_src>

<mosaic_0001>
module attributes {stable_mosaic.version = 11 : i64} {
  func.func @fused_transformer_kernel(%arg0: i32, %arg1: memref<32x8xbf16, #tpu.memory_space<vmem>>, %arg2: memref<16x32xf32, #tpu.memory_space<vmem>>, %arg3: memref<16x64xf32, #tpu.memory_space<vmem>>, %arg4: memref<64x64xf32, #tpu.memory_space<vmem>>, %arg5: memref<64x32xbf16, #tpu.memory_space<vmem>>, %arg6: memref<8x32xbf16, #tpu.memory_space<vmem>>, %arg7: memref<2x32x128xbf16, #tpu.memory_space<vmem>>, %arg8: memref<2x1x128xf32, #tpu.memory_space<vmem>>, %arg9: memref<2x32x32xbf16, #tpu.memory_space<vmem>>, %arg10: memref<2x1x32xf32, #tpu.memory_space<vmem>>, %arg11: memref<2x32x64xbf16, #tpu.memory_space<vmem>>, %arg12: memref<2x1x64xf32, #tpu.memory_space<vmem>>, %arg13: memref<2x64x32xbf16, #tpu.memory_space<vmem>>, %arg14: memref<2x1x32xf32, #tpu.memory_space<vmem>>, %arg15: memref<2x1x32xf32, #tpu.memory_space<vmem>>, %arg16: memref<2x1x32xf32, #tpu.memory_space<vmem>>, %arg17: memref<2x1x32xf32, #tpu.memory_space<vmem>>, %arg18: memref<2x1x32xf32, #tpu.memory_space<vmem>>, %arg19: memref<2x16x32xbf16, #tpu.memory_space<vmem>>) attributes {dimension_semantics = [#tpu.dimension_semantics<parallel>], iteration_bounds = array<i64: 1>, scalar_prefetch = 0 : i64, scratch_operands = 0 : i64, tpu.core_type = #tpu.core_type<tc>, window_params = [{transform_indices = @transform_0, window_bounds = array<i64: 32, 8>}, {pipeline_mode = #tpu.pipeline_mode<synchronous>, transform_indices = @transform_1, window_bounds = array<i64: 16, 32>}, {pipeline_mode = #tpu.pipeline_mode<synchronous>, transform_indices = @transform_2, window_bounds = array<i64: 16, 64>}, {pipeline_mode = #tpu.pipeline_mode<synchronous>, transform_indices = @transform_3, window_bounds = array<i64: 64, 64>}, {pipeline_mode = #tpu.pipeline_mode<synchronous>, transform_indices = @transform_4, window_bounds = array<i64: 64, 32>}, {pipeline_mode = #tpu.pipeline_mode<synchronous>, transform_indices = @transform_5, window_bounds = array<i64: 8, 32>}, {pipeline_mode = #tpu.pipeline_mode<synchronous>, transform_indices = @transform_6, window_bounds = array<i64: 2, 32, 128>}, {pipeline_mode = #tpu.pipeline_mode<synchronous>, transform_indices = @transform_7, window_bounds = array<i64: 2, 1, 128>}, {pipeline_mode = #tpu.pipeline_mode<synchronous>, transform_indices = @transform_8, window_bounds = array<i64: 2, 32, 32>}, {pipeline_mode = #tpu.pipeline_mode<synchronous>, transform_indices = @transform_9, window_bounds = array<i64: 2, 1, 32>}, {pipeline_mode = #tpu.pipeline_mode<synchronous>, transform_indices = @transform_10, window_bounds = array<i64: 2, 32, 64>}, {pipeline_mode = #tpu.pipeline_mode<synchronous>, transform_indices = @transform_11, window_bounds = array<i64: 2, 1, 64>}, {pipeline_mode = #tpu.pipeline_mode<synchronous>, transform_indices = @transform_12, window_bounds = array<i64: 2, 64, 32>}, {pipeline_mode = #tpu.pipeline_mode<synchronous>, transform_indices = @transform_13, window_bounds = array<i64: 2, 1, 32>}, {pipeline_mode = #tpu.pipeline_mode<synchronous>, transform_indices = @transform_14, window_bounds = array<i64: 2, 1, 32>}, {pipeline_mode = #tpu.pipeline_mode<synchronous>, transform_indices = @transform_15, window_bounds = array<i64: 2, 1, 32>}, {pipeline_mode = #tpu.pipeline_mode<synchronous>, transform_indices = @transform_16, window_bounds = array<i64: 2, 1, 32>}, {pipeline_mode = #tpu.pipeline_mode<synchronous>, transform_indices = @transform_17, window_bounds = array<i64: 2, 1, 32>}, {transform_indices = @transform_18, window_bounds = array<i64: 2, 16, 32>}]} {
    %c0 = arith.constant 0 : index
    %c0_0 = arith.constant 0 : index
    %0 = vector.load %arg1[%c0, %c0_0] : memref<32x8xbf16, #tpu.memory_space<vmem>>, vector<32x8xbf16>
    %c0_1 = arith.constant 0 : index
    %c0_2 = arith.constant 0 : index
    %1 = vector.load %arg6[%c0_1, %c0_2] : memref<8x32xbf16, #tpu.memory_space<vmem>>, vector<8x32xbf16>
    %cst = arith.constant dense<0.000000e+00> : vector<32x32xf32>
    %2 = tpu.matmul %0, %1, %cst {dimension_numbers = #tpu.dot_dimension_numbers<[1], [0], [0], [1], [0, 0, 1, 1], [], []>} : vector<32x8xbf16>, vector<8x32xbf16>, vector<32x32xf32> -> vector<32x32xf32>
    %3 = vector.shape_cast %2 : vector<32x32xf32> to vector<2x16x32xf32>
    %c0_3 = arith.constant 0 : index
    %c0_4 = arith.constant 0 : index
    %4 = vector.load %arg2[%c0_3, %c0_4] : memref<16x32xf32, #tpu.memory_space<vmem>>, vector<16x32xf32>
    %5 = vector.shape_cast %4 : vector<16x32xf32> to vector<1x16x32xf32>
    %6 = vector.broadcast %5 : vector<1x16x32xf32> to vector<2x16x32xf32>
    %7 = arith.addf %3, %6 : vector<2x16x32xf32>
    %8 = vector.shape_cast %7 : vector<2x16x32xf32> to vector<32x32xf32>
    %c0_5 = arith.constant 0 : index
    %c0_6 = arith.constant 0 : index
    %9 = vector.load %arg3[%c0_5, %c0_6] : memref<16x64xf32, #tpu.memory_space<vmem>>, vector<16x64xf32>
    %10 = vector.shape_cast %9 : vector<16x64xf32> to vector<1x16x64xf32>
    %11 = vector.shape_cast %10 : vector<1x16x64xf32> to vector<1x16x64xf32>
    %12 = vector.broadcast %11 : vector<1x16x64xf32> to vector<2x16x64xf32>
    %c0_7 = arith.constant 0 : index
    %c0_8 = arith.constant 0 : index
    %13 = vector.load %arg5[%c0_7, %c0_8] : memref<64x32xbf16, #tpu.memory_space<vmem>>, vector<64x32xbf16>
    %14 = vector.shape_cast %13 : vector<64x32xbf16> to vector<1x64x32xbf16>
    %15 = vector.shape_cast %14 : vector<1x64x32xbf16> to vector<1x64x32xbf16>
    %16 = vector.broadcast %15 : vector<1x64x32xbf16> to vector<2x64x32xbf16>
    %c0_9 = arith.constant 0 : index
    %c0_10 = arith.constant 0 : index
    %17 = vector.load %arg4[%c0_9, %c0_10] : memref<64x64xf32, #tpu.memory_space<vmem>>, vector<64x64xf32>
    %18 = arith.truncf %8 : vector<32x32xf32> to vector<32x32xbf16>
    %c0_11 = arith.constant 0 : index
    %c0_12 = arith.constant 0 : index
    %c0_13 = arith.constant 0 : index
    %19 = vector.load %arg7[%c0_11, %c0_12, %c0_13] : memref<2x32x128xbf16, #tpu.memory_space<vmem>>, vector<1x32x128xbf16>
    %20 = vector.shape_cast %19 : vector<1x32x128xbf16> to vector<32x128xbf16>
    %cst_14 = arith.constant dense<0.000000e+00> : vector<32x128xf32>
    %21 = tpu.matmul %18, %20, %cst_14 {dimension_numbers = #tpu.dot_dimension_numbers<[1], [0], [0], [1], [0, 0, 1, 1], [], []>} : vector<32x32xbf16>, vector<32x128xbf16>, vector<32x128xf32> -> vector<32x128xf32>
    %c0_15 = arith.constant 0 : index
    %c0_16 = arith.constant 0 : index
    %c0_17 = arith.constant 0 : index
    %22 = vector.load %arg8[%c0_15, %c0_16, %c0_17] : memref<2x1x128xf32, #tpu.memory_space<vmem>>, vector<1x1x128xf32>
    %23 = vector.shape_cast %22 : vector<1x1x128xf32> to vector<1x128xf32>
    %24 = vector.broadcast %23 : vector<1x128xf32> to vector<32x128xf32>
    %25 = arith.addf %21, %24 : vector<32x128xf32>
    %26 = arith.truncf %25 : vector<32x128xf32> to vector<32x128xbf16>
    %27 = vector.extract_strided_slice %26 {offsets = [0, 0], sizes = [32, 32], strides = [1, 1]} : vector<32x128xbf16> to vector<32x32xbf16>
    %28 = vector.shape_cast %27 : vector<32x32xbf16> to vector<2x16x32xbf16>
    %29 = vector.extract_strided_slice %26 {offsets = [0, 32], sizes = [32, 32], strides = [1, 1]} : vector<32x128xbf16> to vector<32x32xbf16>
    %30 = vector.shape_cast %29 : vector<32x32xbf16> to vector<2x16x32xbf16>
    %31 = vector.extract_strided_slice %26 {offsets = [0, 64], sizes = [32, 32], strides = [1, 1]} : vector<32x128xbf16> to vector<32x32xbf16>
    %32 = vector.shape_cast %31 : vector<32x32xbf16> to vector<2x16x32xbf16>
    %33 = tpu.concatenate %30, %30, %30, %30 in 1 : vector<2x16x32xbf16>, vector<2x16x32xbf16>, vector<2x16x32xbf16>, vector<2x16x32xbf16> -> vector<2x64x32xbf16>
    %34 = arith.mulf %33, %16 : vector<2x64x32xbf16>
    %35 = tpu.concatenate %32, %32, %32, %32 in 1 : vector<2x16x32xbf16>, vector<2x16x32xbf16>, vector<2x16x32xbf16>, vector<2x16x32xbf16> -> vector<2x64x32xbf16>
    %36 = arith.mulf %35, %16 : vector<2x64x32xbf16>
    "tpu.trace_start"() <{level = 10 : i32, message = "bnd,bmd->bnm"}> : () -> ()
    %cst_18 = arith.constant dense<0.000000e+00> : vector<2x16x64xf32>
    %37 = tpu.matmul %28, %34, %cst_18 {dimension_numbers = #tpu.dot_dimension_numbers<[2], [2], [1], [1], [0, 0, 0, 1, 1, 1], [0], [0]>} : vector<2x16x32xbf16>, vector<2x64x32xbf16>, vector<2x16x64xf32> -> vector<2x16x64xf32>
    "tpu.trace_stop"() : () -> ()
    %38 = arith.addf %37, %12 : vector<2x16x64xf32>
    %39 = vector.shape_cast %38 : vector<2x16x64xf32> to vector<32x64xf32>
    %cst_19 = arith.constant dense<0xFF800000> : vector<32xf32>
    %40 = vector.multi_reduction <maximumf>, %39, %cst_19 [1] : vector<32x64xf32> to vector<32xf32>
    %41 = vector.shape_cast %40 : vector<32xf32> to vector<32x1xf32>
    %42 = vector.broadcast %41 : vector<32x1xf32> to vector<32x64xf32>
    %43 = arith.subf %39, %42 : vector<32x64xf32>
    %44 = math.exp %43 : vector<32x64xf32>
    %cst_20 = arith.constant dense<0.000000e+00> : vector<32x64xf32>
    %45 = tpu.matmul %44, %17, %cst_20 {dimension_numbers = #tpu.dot_dimension_numbers<[1], [0], [0], [1], [0, 0, 1, 1], [], []>} : vector<32x64xf32>, vector<64x64xf32>, vector<32x64xf32> -> vector<32x64xf32>
    %46 = tpu.reciprocal %45 {approx = true} : vector<32x64xf32> -> vector<32x64xf32>
    %47 = arith.mulf %44, %46 : vector<32x64xf32>
    %48 = vector.shape_cast %47 : vector<32x64xf32> to vector<2x16x64xf32>
    %49 = arith.truncf %48 : vector<2x16x64xf32> to vector<2x16x64xbf16>
    "tpu.trace_start"() <{level = 10 : i32, message = "bnm,bmd->bnd"}> : () -> ()
    %cst_21 = arith.constant dense<0.000000e+00> : vector<2x16x32xf32>
    %50 = tpu.matmul %49, %36, %cst_21 {dimension_numbers = #tpu.dot_dimension_numbers<[2], [1], [1], [2], [0, 0, 0, 1, 1, 2], [0], [0]>} : vector<2x16x64xbf16>, vector<2x64x32xbf16>, vector<2x16x32xf32> -> vector<2x16x32xf32>
    "tpu.trace_stop"() : () -> ()
    %51 = vector.shape_cast %50 : vector<2x16x32xf32> to vector<32x32xf32>
    %52 = arith.truncf %51 : vector<32x32xf32> to vector<32x32xbf16>
    %c0_22 = arith.constant 0 : index
    %c0_23 = arith.constant 0 : index
    %c0_24 = arith.constant 0 : index
    %53 = vector.load %arg9[%c0_22, %c0_23, %c0_24] : memref<2x32x32xbf16, #tpu.memory_space<vmem>>, vector<1x32x32xbf16>
    %54 = vector.shape_cast %53 : vector<1x32x32xbf16> to vector<32x32xbf16>
    %cst_25 = arith.constant dense<0.000000e+00> : vector<32x32xf32>
    %55 = tpu.matmul %52, %54, %cst_25 {dimension_numbers = #tpu.dot_dimension_numbers<[1], [0], [0], [1], [0, 0, 1, 1], [], []>} : vector<32x32xbf16>, vector<32x32xbf16>, vector<32x32xf32> -> vector<32x32xf32>
    %56 = arith.addf %8, %55 : vector<32x32xf32>
    %c0_26 = arith.constant 0 : index
    %c0_27 = arith.constant 0 : index
    %c0_28 = arith.constant 0 : index
    %57 = vector.load %arg10[%c0_26, %c0_27, %c0_28] : memref<2x1x32xf32, #tpu.memory_space<vmem>>, vector<1x1x32xf32>
    %58 = vector.shape_cast %57 : vector<1x1x32xf32> to vector<1x32xf32>
    %59 = vector.broadcast %58 : vector<1x32xf32> to vector<32x32xf32>
    %60 = arith.addf %56, %59 : vector<32x32xf32>
    %c0_29 = arith.constant 0 : index
    %c0_30 = arith.constant 0 : index
    %c0_31 = arith.constant 0 : index
    %61 = vector.load %arg15[%c0_29, %c0_30, %c0_31] : memref<2x1x32xf32, #tpu.memory_space<vmem>>, vector<1x1x32xf32>
    %62 = vector.shape_cast %61 : vector<1x1x32xf32> to vector<1x32xf32>
    %c0_32 = arith.constant 0 : index
    %c0_33 = arith.constant 0 : index
    %c0_34 = arith.constant 0 : index
    %63 = vector.load %arg16[%c0_32, %c0_33, %c0_34] : memref<2x1x32xf32, #tpu.memory_space<vmem>>, vector<1x1x32xf32>
    %64 = vector.shape_cast %63 : vector<1x1x32xf32> to vector<1x32xf32>
    %cst_35 = arith.constant dense<0.000000e+00> : vector<32xf32>
    %65 = vector.multi_reduction <add>, %60, %cst_35 [1] : vector<32x32xf32> to vector<32xf32>
    %66 = vector.shape_cast %65 : vector<32xf32> to vector<32x1xf32>
    %cst_36 = arith.constant 3.200000e+01 : f32
    %67 = vector.broadcast %cst_36 : f32 to vector<32x1xf32>
    %68 = arith.divf %66, %67 : vector<32x1xf32>
    %69 = vector.broadcast %68 : vector<32x1xf32> to vector<32x32xf32>
    %70 = arith.subf %60, %69 : vector<32x32xf32>
    %71 = arith.mulf %70, %70 : vector<32x32xf32>
    %cst_37 = arith.constant dense<0.000000e+00> : vector<32xf32>
    %72 = vector.multi_reduction <add>, %71, %cst_37 [1] : vector<32x32xf32> to vector<32xf32>
    %73 = vector.shape_cast %72 : vector<32xf32> to vector<32x1xf32>
    %cst_38 = arith.constant 3.200000e+01 : f32
    %74 = vector.broadcast %cst_38 : f32 to vector<32x1xf32>
    %75 = arith.divf %73, %74 : vector<32x1xf32>
    %76 = vector.broadcast %68 : vector<32x1xf32> to vector<32x32xf32>
    %77 = arith.subf %60, %76 : vector<32x32xf32>
    %cst_39 = arith.constant 9.99999974E-6 : f32
    %78 = vector.broadcast %cst_39 : f32 to vector<32x1xf32>
    %79 = arith.addf %75, %78 : vector<32x1xf32>
    %80 = math.rsqrt %79 : vector<32x1xf32>
    %81 = vector.broadcast %80 : vector<32x1xf32> to vector<32x32xf32>
    %82 = arith.mulf %77, %81 : vector<32x32xf32>
    %83 = vector.broadcast %62 : vector<1x32xf32> to vector<32x32xf32>
    %84 = arith.mulf %82, %83 : vector<32x32xf32>
    %85 = vector.broadcast %64 : vector<1x32xf32> to vector<32x32xf32>
    %86 = arith.addf %84, %85 : vector<32x32xf32>
    %87 = arith.truncf %86 : vector<32x32xf32> to vector<32x32xbf16>
    %c0_40 = arith.constant 0 : index
    %c0_41 = arith.constant 0 : index
    %c0_42 = arith.constant 0 : index
    %88 = vector.load %arg11[%c0_40, %c0_41, %c0_42] : memref<2x32x64xbf16, #tpu.memory_space<vmem>>, vector<1x32x64xbf16>
    %89 = vector.shape_cast %88 : vector<1x32x64xbf16> to vector<32x64xbf16>
    %cst_43 = arith.constant dense<0.000000e+00> : vector<32x64xf32>
    %90 = tpu.matmul %87, %89, %cst_43 {dimension_numbers = #tpu.dot_dimension_numbers<[1], [0], [0], [1], [0, 0, 1, 1], [], []>} : vector<32x32xbf16>, vector<32x64xbf16>, vector<32x64xf32> -> vector<32x64xf32>
    %c0_44 = arith.constant 0 : index
    %c0_45 = arith.constant 0 : index
    %c0_46 = arith.constant 0 : index
    %91 = vector.load %arg12[%c0_44, %c0_45, %c0_46] : memref<2x1x64xf32, #tpu.memory_space<vmem>>, vector<1x1x64xf32>
    %92 = vector.shape_cast %91 : vector<1x1x64xf32> to vector<1x64xf32>
    %93 = vector.broadcast %92 : vector<1x64xf32> to vector<32x64xf32>
    %94 = arith.addf %90, %93 : vector<32x64xf32>
    %cst_47 = arith.constant 0.000000e+00 : f32
    %95 = vector.broadcast %cst_47 : f32 to vector<32x64xf32>
    %96 = arith.maximumf %94, %95 : vector<32x64xf32>
    %97 = arith.truncf %96 : vector<32x64xf32> to vector<32x64xbf16>
    %c0_48 = arith.constant 0 : index
    %c0_49 = arith.constant 0 : index
    %c0_50 = arith.constant 0 : index
    %98 = vector.load %arg13[%c0_48, %c0_49, %c0_50] : memref<2x64x32xbf16, #tpu.memory_space<vmem>>, vector<1x64x32xbf16>
    %99 = vector.shape_cast %98 : vector<1x64x32xbf16> to vector<64x32xbf16>
    %cst_51 = arith.constant dense<0.000000e+00> : vector<32x32xf32>
    %100 = tpu.matmul %97, %99, %cst_51 {dimension_numbers = #tpu.dot_dimension_numbers<[1], [0], [0], [1], [0, 0, 1, 1], [], []>} : vector<32x64xbf16>, vector<64x32xbf16>, vector<32x32xf32> -> vector<32x32xf32>
    %c0_52 = arith.constant 0 : index
    %c0_53 = arith.constant 0 : index
    %c0_54 = arith.constant 0 : index
    %101 = vector.load %arg14[%c0_52, %c0_53, %c0_54] : memref<2x1x32xf32, #tpu.memory_space<vmem>>, vector<1x1x32xf32>
    %102 = vector.shape_cast %101 : vector<1x1x32xf32> to vector<1x32xf32>
    %103 = vector.broadcast %102 : vector<1x32xf32> to vector<32x32xf32>
    %104 = arith.addf %100, %103 : vector<32x32xf32>
    %105 = arith.addf %86, %104 : vector<32x32xf32>
    %c0_55 = arith.constant 0 : index
    %c0_56 = arith.constant 0 : index
    %c0_57 = arith.constant 0 : index
    %106 = vector.load %arg17[%c0_55, %c0_56, %c0_57] : memref<2x1x32xf32, #tpu.memory_space<vmem>>, vector<1x1x32xf32>
    %107 = vector.shape_cast %106 : vector<1x1x32xf32> to vector<1x32xf32>
    %c0_58 = arith.constant 0 : index
    %c0_59 = arith.constant 0 : index
    %c0_60 = arith.constant 0 : index
    %108 = vector.load %arg18[%c0_58, %c0_59, %c0_60] : memref<2x1x32xf32, #tpu.memory_space<vmem>>, vector<1x1x32xf32>
    %109 = vector.shape_cast %108 : vector<1x1x32xf32> to vector<1x32xf32>
    %cst_61 = arith.constant dense<0.000000e+00> : vector<32xf32>
    %110 = vector.multi_reduction <add>, %105, %cst_61 [1] : vector<32x32xf32> to vector<32xf32>
    %111 = vector.shape_cast %110 : vector<32xf32> to vector<32x1xf32>
    %cst_62 = arith.constant 3.200000e+01 : f32
    %112 = vector.broadcast %cst_62 : f32 to vector<32x1xf32>
    %113 = arith.divf %111, %112 : vector<32x1xf32>
    %114 = vector.broadcast %113 : vector<32x1xf32> to vector<32x32xf32>
    %115 = arith.subf %105, %114 : vector<32x32xf32>
    %116 = arith.mulf %115, %115 : vector<32x32xf32>
    %cst_63 = arith.constant dense<0.000000e+00> : vector<32xf32>
    %117 = vector.multi_reduction <add>, %116, %cst_63 [1] : vector<32x32xf32> to vector<32xf32>
    %118 = vector.shape_cast %117 : vector<32xf32> to vector<32x1xf32>
    %cst_64 = arith.constant 3.200000e+01 : f32
    %119 = vector.broadcast %cst_64 : f32 to vector<32x1xf32>
    %120 = arith.divf %118, %119 : vector<32x1xf32>
    %121 = vector.broadcast %113 : vector<32x1xf32> to vector<32x32xf32>
    %122 = arith.subf %105, %121 : vector<32x32xf32>
    %cst_65 = arith.constant 9.99999974E-6 : f32
    %123 = vector.broadcast %cst_65 : f32 to vector<32x1xf32>
    %124 = arith.addf %120, %123 : vector<32x1xf32>
    %125 = math.rsqrt %124 : vector<32x1xf32>
    %126 = vector.broadcast %125 : vector<32x1xf32> to vector<32x32xf32>
    %127 = arith.mulf %122, %126 : vector<32x32xf32>
    %128 = vector.broadcast %107 : vector<1x32xf32> to vector<32x32xf32>
    %129 = arith.mulf %127, %128 : vector<32x32xf32>
    %130 = vector.broadcast %109 : vector<1x32xf32> to vector<32x32xf32>
    %131 = arith.addf %129, %130 : vector<32x32xf32>
    %132 = arith.truncf %131 : vector<32x32xf32> to vector<32x32xbf16>
    %c1 = arith.constant 1 : index
    %c0_66 = arith.constant 0 : index
    %c0_67 = arith.constant 0 : index
    %133 = vector.load %arg7[%c1, %c0_66, %c0_67] : memref<2x32x128xbf16, #tpu.memory_space<vmem>>, vector<1x32x128xbf16>
    %134 = vector.shape_cast %133 : vector<1x32x128xbf16> to vector<32x128xbf16>
    %cst_68 = arith.constant dense<0.000000e+00> : vector<32x128xf32>
    %135 = tpu.matmul %132, %134, %cst_68 {dimension_numbers = #tpu.dot_dimension_numbers<[1], [0], [0], [1], [0, 0, 1, 1], [], []>} : vector<32x32xbf16>, vector<32x128xbf16>, vector<32x128xf32> -> vector<32x128xf32>
    %c1_69 = arith.constant 1 : index
    %c0_70 = arith.constant 0 : index
    %c0_71 = arith.constant 0 : index
    %136 = vector.load %arg8[%c1_69, %c0_70, %c0_71] : memref<2x1x128xf32, #tpu.memory_space<vmem>>, vector<1x1x128xf32>
    %137 = vector.shape_cast %136 : vector<1x1x128xf32> to vector<1x128xf32>
    %138 = vector.broadcast %137 : vector<1x128xf32> to vector<32x128xf32>
    %139 = arith.addf %135, %138 : vector<32x128xf32>
    %140 = arith.truncf %139 : vector<32x128xf32> to vector<32x128xbf16>
    %141 = vector.extract_strided_slice %140 {offsets = [0, 0], sizes = [32, 32], strides = [1, 1]} : vector<32x128xbf16> to vector<32x32xbf16>
    %142 = vector.shape_cast %141 : vector<32x32xbf16> to vector<2x16x32xbf16>
    %143 = vector.extract_strided_slice %140 {offsets = [0, 32], sizes = [32, 32], strides = [1, 1]} : vector<32x128xbf16> to vector<32x32xbf16>
    %144 = vector.shape_cast %143 : vector<32x32xbf16> to vector<2x16x32xbf16>
    %145 = vector.extract_strided_slice %140 {offsets = [0, 64], sizes = [32, 32], strides = [1, 1]} : vector<32x128xbf16> to vector<32x32xbf16>
    %146 = vector.shape_cast %145 : vector<32x32xbf16> to vector<2x16x32xbf16>
    %147 = tpu.concatenate %144, %144, %144, %144 in 1 : vector<2x16x32xbf16>, vector<2x16x32xbf16>, vector<2x16x32xbf16>, vector<2x16x32xbf16> -> vector<2x64x32xbf16>
    %148 = arith.mulf %147, %16 : vector<2x64x32xbf16>
    %149 = tpu.concatenate %146, %146, %146, %146 in 1 : vector<2x16x32xbf16>, vector<2x16x32xbf16>, vector<2x16x32xbf16>, vector<2x16x32xbf16> -> vector<2x64x32xbf16>
    %150 = arith.mulf %149, %16 : vector<2x64x32xbf16>
    "tpu.trace_start"() <{level = 10 : i32, message = "bnd,bmd->bnm"}> : () -> ()
    %cst_72 = arith.constant dense<0.000000e+00> : vector<2x16x64xf32>
    %151 = tpu.matmul %142, %148, %cst_72 {dimension_numbers = #tpu.dot_dimension_numbers<[2], [2], [1], [1], [0, 0, 0, 1, 1, 1], [0], [0]>} : vector<2x16x32xbf16>, vector<2x64x32xbf16>, vector<2x16x64xf32> -> vector<2x16x64xf32>
    "tpu.trace_stop"() : () -> ()
    %152 = arith.addf %151, %12 : vector<2x16x64xf32>
    %153 = vector.shape_cast %152 : vector<2x16x64xf32> to vector<32x64xf32>
    %cst_73 = arith.constant dense<0xFF800000> : vector<32xf32>
    %154 = vector.multi_reduction <maximumf>, %153, %cst_73 [1] : vector<32x64xf32> to vector<32xf32>
    %155 = vector.shape_cast %154 : vector<32xf32> to vector<32x1xf32>
    %156 = vector.broadcast %155 : vector<32x1xf32> to vector<32x64xf32>
    %157 = arith.subf %153, %156 : vector<32x64xf32>
    %158 = math.exp %157 : vector<32x64xf32>
    %cst_74 = arith.constant dense<0.000000e+00> : vector<32x64xf32>
    %159 = tpu.matmul %158, %17, %cst_74 {dimension_numbers = #tpu.dot_dimension_numbers<[1], [0], [0], [1], [0, 0, 1, 1], [], []>} : vector<32x64xf32>, vector<64x64xf32>, vector<32x64xf32> -> vector<32x64xf32>
    %160 = tpu.reciprocal %159 {approx = true} : vector<32x64xf32> -> vector<32x64xf32>
    %161 = arith.mulf %158, %160 : vector<32x64xf32>
    %162 = vector.shape_cast %161 : vector<32x64xf32> to vector<2x16x64xf32>
    %163 = arith.truncf %162 : vector<2x16x64xf32> to vector<2x16x64xbf16>
    "tpu.trace_start"() <{level = 10 : i32, message = "bnm,bmd->bnd"}> : () -> ()
    %cst_75 = arith.constant dense<0.000000e+00> : vector<2x16x32xf32>
    %164 = tpu.matmul %163, %150, %cst_75 {dimension_numbers = #tpu.dot_dimension_numbers<[2], [1], [1], [2], [0, 0, 0, 1, 1, 2], [0], [0]>} : vector<2x16x64xbf16>, vector<2x64x32xbf16>, vector<2x16x32xf32> -> vector<2x16x32xf32>
    "tpu.trace_stop"() : () -> ()
    %165 = vector.shape_cast %164 : vector<2x16x32xf32> to vector<32x32xf32>
    %166 = arith.truncf %165 : vector<32x32xf32> to vector<32x32xbf16>
    %c1_76 = arith.constant 1 : index
    %c0_77 = arith.constant 0 : index
    %c0_78 = arith.constant 0 : index
    %167 = vector.load %arg9[%c1_76, %c0_77, %c0_78] : memref<2x32x32xbf16, #tpu.memory_space<vmem>>, vector<1x32x32xbf16>
    %168 = vector.shape_cast %167 : vector<1x32x32xbf16> to vector<32x32xbf16>
    %cst_79 = arith.constant dense<0.000000e+00> : vector<32x32xf32>
    %169 = tpu.matmul %166, %168, %cst_79 {dimension_numbers = #tpu.dot_dimension_numbers<[1], [0], [0], [1], [0, 0, 1, 1], [], []>} : vector<32x32xbf16>, vector<32x32xbf16>, vector<32x32xf32> -> vector<32x32xf32>
    %170 = arith.addf %131, %169 : vector<32x32xf32>
    %c1_80 = arith.constant 1 : index
    %c0_81 = arith.constant 0 : index
    %c0_82 = arith.constant 0 : index
    %171 = vector.load %arg10[%c1_80, %c0_81, %c0_82] : memref<2x1x32xf32, #tpu.memory_space<vmem>>, vector<1x1x32xf32>
    %172 = vector.shape_cast %171 : vector<1x1x32xf32> to vector<1x32xf32>
    %173 = vector.broadcast %172 : vector<1x32xf32> to vector<32x32xf32>
    %174 = arith.addf %170, %173 : vector<32x32xf32>
    %c1_83 = arith.constant 1 : index
    %c0_84 = arith.constant 0 : index
    %c0_85 = arith.constant 0 : index
    %175 = vector.load %arg15[%c1_83, %c0_84, %c0_85] : memref<2x1x32xf32, #tpu.memory_space<vmem>>, vector<1x1x32xf32>
    %176 = vector.shape_cast %175 : vector<1x1x32xf32> to vector<1x32xf32>
    %c1_86 = arith.constant 1 : index
    %c0_87 = arith.constant 0 : index
    %c0_88 = arith.constant 0 : index
    %177 = vector.load %arg16[%c1_86, %c0_87, %c0_88] : memref<2x1x32xf32, #tpu.memory_space<vmem>>, vector<1x1x32xf32>
    %178 = vector.shape_cast %177 : vector<1x1x32xf32> to vector<1x32xf32>
    %cst_89 = arith.constant dense<0.000000e+00> : vector<32xf32>
    %179 = vector.multi_reduction <add>, %174, %cst_89 [1] : vector<32x32xf32> to vector<32xf32>
    %180 = vector.shape_cast %179 : vector<32xf32> to vector<32x1xf32>
    %cst_90 = arith.constant 3.200000e+01 : f32
    %181 = vector.broadcast %cst_90 : f32 to vector<32x1xf32>
    %182 = arith.divf %180, %181 : vector<32x1xf32>
    %183 = vector.broadcast %182 : vector<32x1xf32> to vector<32x32xf32>
    %184 = arith.subf %174, %183 : vector<32x32xf32>
    %185 = arith.mulf %184, %184 : vector<32x32xf32>
    %cst_91 = arith.constant dense<0.000000e+00> : vector<32xf32>
    %186 = vector.multi_reduction <add>, %185, %cst_91 [1] : vector<32x32xf32> to vector<32xf32>
    %187 = vector.shape_cast %186 : vector<32xf32> to vector<32x1xf32>
    %cst_92 = arith.constant 3.200000e+01 : f32
    %188 = vector.broadcast %cst_92 : f32 to vector<32x1xf32>
    %189 = arith.divf %187, %188 : vector<32x1xf32>
    %190 = vector.broadcast %182 : vector<32x1xf32> to vector<32x32xf32>
    %191 = arith.subf %174, %190 : vector<32x32xf32>
    %cst_93 = arith.constant 9.99999974E-6 : f32
    %192 = vector.broadcast %cst_93 : f32 to vector<32x1xf32>
    %193 = arith.addf %189, %192 : vector<32x1xf32>
    %194 = math.rsqrt %193 : vector<32x1xf32>
    %195 = vector.broadcast %194 : vector<32x1xf32> to vector<32x32xf32>
    %196 = arith.mulf %191, %195 : vector<32x32xf32>
    %197 = vector.broadcast %176 : vector<1x32xf32> to vector<32x32xf32>
    %198 = arith.mulf %196, %197 : vector<32x32xf32>
    %199 = vector.broadcast %178 : vector<1x32xf32> to vector<32x32xf32>
    %200 = arith.addf %198, %199 : vector<32x32xf32>
    %201 = arith.truncf %200 : vector<32x32xf32> to vector<32x32xbf16>
    %c1_94 = arith.constant 1 : index
    %c0_95 = arith.constant 0 : index
    %c0_96 = arith.constant 0 : index
    %202 = vector.load %arg11[%c1_94, %c0_95, %c0_96] : memref<2x32x64xbf16, #tpu.memory_space<vmem>>, vector<1x32x64xbf16>
    %203 = vector.shape_cast %202 : vector<1x32x64xbf16> to vector<32x64xbf16>
    %cst_97 = arith.constant dense<0.000000e+00> : vector<32x64xf32>
    %204 = tpu.matmul %201, %203, %cst_97 {dimension_numbers = #tpu.dot_dimension_numbers<[1], [0], [0], [1], [0, 0, 1, 1], [], []>} : vector<32x32xbf16>, vector<32x64xbf16>, vector<32x64xf32> -> vector<32x64xf32>
    %c1_98 = arith.constant 1 : index
    %c0_99 = arith.constant 0 : index
    %c0_100 = arith.constant 0 : index
    %205 = vector.load %arg12[%c1_98, %c0_99, %c0_100] : memref<2x1x64xf32, #tpu.memory_space<vmem>>, vector<1x1x64xf32>
    %206 = vector.shape_cast %205 : vector<1x1x64xf32> to vector<1x64xf32>
    %207 = vector.broadcast %206 : vector<1x64xf32> to vector<32x64xf32>
    %208 = arith.addf %204, %207 : vector<32x64xf32>
    %cst_101 = arith.constant 0.000000e+00 : f32
    %209 = vector.broadcast %cst_101 : f32 to vector<32x64xf32>
    %210 = arith.maximumf %208, %209 : vector<32x64xf32>
    %211 = arith.truncf %210 : vector<32x64xf32> to vector<32x64xbf16>
    %c1_102 = arith.constant 1 : index
    %c0_103 = arith.constant 0 : index
    %c0_104 = arith.constant 0 : index
    %212 = vector.load %arg13[%c1_102, %c0_103, %c0_104] : memref<2x64x32xbf16, #tpu.memory_space<vmem>>, vector<1x64x32xbf16>
    %213 = vector.shape_cast %212 : vector<1x64x32xbf16> to vector<64x32xbf16>
    %cst_105 = arith.constant dense<0.000000e+00> : vector<32x32xf32>
    %214 = tpu.matmul %211, %213, %cst_105 {dimension_numbers = #tpu.dot_dimension_numbers<[1], [0], [0], [1], [0, 0, 1, 1], [], []>} : vector<32x64xbf16>, vector<64x32xbf16>, vector<32x32xf32> -> vector<32x32xf32>
    %c1_106 = arith.constant 1 : index
    %c0_107 = arith.constant 0 : index
    %c0_108 = arith.constant 0 : index
    %215 = vector.load %arg14[%c1_106, %c0_107, %c0_108] : memref<2x1x32xf32, #tpu.memory_space<vmem>>, vector<1x1x32xf32>
    %216 = vector.shape_cast %215 : vector<1x1x32xf32> to vector<1x32xf32>
    %217 = vector.broadcast %216 : vector<1x32xf32> to vector<32x32xf32>
    %218 = arith.addf %214, %217 : vector<32x32xf32>
    %219 = arith.addf %200, %218 : vector<32x32xf32>
    %c1_109 = arith.constant 1 : index
    %c0_110 = arith.constant 0 : index
    %c0_111 = arith.constant 0 : index
    %220 = vector.load %arg17[%c1_109, %c0_110, %c0_111] : memref<2x1x32xf32, #tpu.memory_space<vmem>>, vector<1x1x32xf32>
    %221 = vector.shape_cast %220 : vector<1x1x32xf32> to vector<1x32xf32>
    %c1_112 = arith.constant 1 : index
    %c0_113 = arith.constant 0 : index
    %c0_114 = arith.constant 0 : index
    %222 = vector.load %arg18[%c1_112, %c0_113, %c0_114] : memref<2x1x32xf32, #tpu.memory_space<vmem>>, vector<1x1x32xf32>
    %223 = vector.shape_cast %222 : vector<1x1x32xf32> to vector<1x32xf32>
    %cst_115 = arith.constant dense<0.000000e+00> : vector<32xf32>
    %224 = vector.multi_reduction <add>, %219, %cst_115 [1] : vector<32x32xf32> to vector<32xf32>
    %225 = vector.shape_cast %224 : vector<32xf32> to vector<32x1xf32>
    %cst_116 = arith.constant 3.200000e+01 : f32
    %226 = vector.broadcast %cst_116 : f32 to vector<32x1xf32>
    %227 = arith.divf %225, %226 : vector<32x1xf32>
    %228 = vector.broadcast %227 : vector<32x1xf32> to vector<32x32xf32>
    %229 = arith.subf %219, %228 : vector<32x32xf32>
    %230 = arith.mulf %229, %229 : vector<32x32xf32>
    %cst_117 = arith.constant dense<0.000000e+00> : vector<32xf32>
    %231 = vector.multi_reduction <add>, %230, %cst_117 [1] : vector<32x32xf32> to vector<32xf32>
    %232 = vector.shape_cast %231 : vector<32xf32> to vector<32x1xf32>
    %cst_118 = arith.constant 3.200000e+01 : f32
    %233 = vector.broadcast %cst_118 : f32 to vector<32x1xf32>
    %234 = arith.divf %232, %233 : vector<32x1xf32>
    %235 = vector.broadcast %227 : vector<32x1xf32> to vector<32x32xf32>
    %236 = arith.subf %219, %235 : vector<32x32xf32>
    %cst_119 = arith.constant 9.99999974E-6 : f32
    %237 = vector.broadcast %cst_119 : f32 to vector<32x1xf32>
    %238 = arith.addf %234, %237 : vector<32x1xf32>
    %239 = math.rsqrt %238 : vector<32x1xf32>
    %240 = vector.broadcast %239 : vector<32x1xf32> to vector<32x32xf32>
    %241 = arith.mulf %236, %240 : vector<32x32xf32>
    %242 = vector.broadcast %221 : vector<1x32xf32> to vector<32x32xf32>
    %243 = arith.mulf %241, %242 : vector<32x32xf32>
    %244 = vector.broadcast %223 : vector<1x32xf32> to vector<32x32xf32>
    %245 = arith.addf %243, %244 : vector<32x32xf32>
    %246 = vector.shape_cast %245 : vector<32x32xf32> to vector<2x16x32xf32>
    %247 = arith.truncf %246 : vector<2x16x32xf32> to vector<2x16x32xbf16>
    %c0_120 = arith.constant 0 : index
    %c0_121 = arith.constant 0 : index
    %c0_122 = arith.constant 0 : index
    %248 = vector.load %arg19[%c0_120, %c0_121, %c0_122] : memref<2x16x32xbf16, #tpu.memory_space<vmem>>, vector<2x16x32xbf16>
    tpu.vector_store %arg19[%c0_120, %c0_121, %c0_122], %247 {strides = array<i32>} : memref<2x16x32xbf16, #tpu.memory_space<vmem>>, vector<2x16x32xbf16>,
    return
  }
  func.func @transform_0(%arg0: i32) -> (i32, i32) {
    %c0_i32 = arith.constant 0 : i32
    %c0_i32_0 = arith.constant 0 : i32
    return %arg0, %c0_i32 : i32, i32
  }
  func.func @transform_1(%arg0: i32) -> (i32, i32) {
    %c0_i32 = arith.constant 0 : i32
    %c0_i32_0 = arith.constant 0 : i32
    %c0_i32_1 = arith.constant 0 : i32
    return %c0_i32, %c0_i32_0 : i32, i32
  }
  func.func @transform_2(%arg0: i32) -> (i32, i32) {
    %c0_i32 = arith.constant 0 : i32
    %c0_i32_0 = arith.constant 0 : i32
    %c0_i32_1 = arith.constant 0 : i32
    return %c0_i32, %c0_i32_0 : i32, i32
  }
  func.func @transform_3(%arg0: i32) -> (i32, i32) {
    %c0_i32 = arith.constant 0 : i32
    %c0_i32_0 = arith.constant 0 : i32
    %c0_i32_1 = arith.constant 0 : i32
    return %c0_i32, %c0_i32_0 : i32, i32
  }
  func.func @transform_4(%arg0: i32) -> (i32, i32) {
    %c0_i32 = arith.constant 0 : i32
    %c0_i32_0 = arith.constant 0 : i32
    %c0_i32_1 = arith.constant 0 : i32
    return %c0_i32, %c0_i32_0 : i32, i32
  }
  func.func @transform_5(%arg0: i32) -> (i32, i32) {
    %c0_i32 = arith.constant 0 : i32
    %c0_i32_0 = arith.constant 0 : i32
    %c0_i32_1 = arith.constant 0 : i32
    return %c0_i32, %c0_i32_0 : i32, i32
  }
  func.func @transform_6(%arg0: i32) -> (i32, i32, i32) {
    %c0_i32 = arith.constant 0 : i32
    %c0_i32_0 = arith.constant 0 : i32
    %c0_i32_1 = arith.constant 0 : i32
    %c0_i32_2 = arith.constant 0 : i32
    return %c0_i32, %c0_i32_0, %c0_i32_1 : i32, i32, i32
  }
  func.func @transform_7(%arg0: i32) -> (i32, i32, i32) {
    %c0_i32 = arith.constant 0 : i32
    %c0_i32_0 = arith.constant 0 : i32
    %c0_i32_1 = arith.constant 0 : i32
    %c0_i32_2 = arith.constant 0 : i32
    return %c0_i32, %c0_i32_0, %c0_i32_1 : i32, i32, i32
  }
  func.func @transform_8(%arg0: i32) -> (i32, i32, i32) {
    %c0_i32 = arith.constant 0 : i32
    %c0_i32_0 = arith.constant 0 : i32
    %c0_i32_1 = arith.constant 0 : i32
    %c0_i32_2 = arith.constant 0 : i32
    return %c0_i32, %c0_i32_0, %c0_i32_1 : i32, i32, i32
  }
  func.func @transform_9(%arg0: i32) -> (i32, i32, i32) {
    %c0_i32 = arith.constant 0 : i32
    %c0_i32_0 = arith.constant 0 : i32
    %c0_i32_1 = arith.constant 0 : i32
    %c0_i32_2 = arith.constant 0 : i32
    return %c0_i32, %c0_i32_0, %c0_i32_1 : i32, i32, i32
  }
  func.func @transform_10(%arg0: i32) -> (i32, i32, i32) {
    %c0_i32 = arith.constant 0 : i32
    %c0_i32_0 = arith.constant 0 : i32
    %c0_i32_1 = arith.constant 0 : i32
    %c0_i32_2 = arith.constant 0 : i32
    return %c0_i32, %c0_i32_0, %c0_i32_1 : i32, i32, i32
  }
  func.func @transform_11(%arg0: i32) -> (i32, i32, i32) {
    %c0_i32 = arith.constant 0 : i32
    %c0_i32_0 = arith.constant 0 : i32
    %c0_i32_1 = arith.constant 0 : i32
    %c0_i32_2 = arith.constant 0 : i32
    return %c0_i32, %c0_i32_0, %c0_i32_1 : i32, i32, i32
  }
  func.func @transform_12(%arg0: i32) -> (i32, i32, i32) {
    %c0_i32 = arith.constant 0 : i32
    %c0_i32_0 = arith.constant 0 : i32
    %c0_i32_1 = arith.constant 0 : i32
    %c0_i32_2 = arith.constant 0 : i32
    return %c0_i32, %c0_i32_0, %c0_i32_1 : i32, i32, i32
  }
  func.func @transform_13(%arg0: i32) -> (i32, i32, i32) {
    %c0_i32 = arith.constant 0 : i32
    %c0_i32_0 = arith.constant 0 : i32
    %c0_i32_1 = arith.constant 0 : i32
    %c0_i32_2 = arith.constant 0 : i32
    return %c0_i32, %c0_i32_0, %c0_i32_1 : i32, i32, i32
  }
  func.func @transform_14(%arg0: i32) -> (i32, i32, i32) {
    %c0_i32 = arith.constant 0 : i32
    %c0_i32_0 = arith.constant 0 : i32
    %c0_i32_1 = arith.constant 0 : i32
    %c0_i32_2 = arith.constant 0 : i32
    return %c0_i32, %c0_i32_0, %c0_i32_1 : i32, i32, i32
  }
  func.func @transform_15(%arg0: i32) -> (i32, i32, i32) {
    %c0_i32 = arith.constant 0 : i32
    %c0_i32_0 = arith.constant 0 : i32
    %c0_i32_1 = arith.constant 0 : i32
    %c0_i32_2 = arith.constant 0 : i32
    return %c0_i32, %c0_i32_0, %c0_i32_1 : i32, i32, i32
  }
  func.func @transform_16(%arg0: i32) -> (i32, i32, i32) {
    %c0_i32 = arith.constant 0 : i32
    %c0_i32_0 = arith.constant 0 : i32
    %c0_i32_1 = arith.constant 0 : i32
    %c0_i32_2 = arith.constant 0 : i32
    return %c0_i32, %c0_i32_0, %c0_i32_1 : i32, i32, i32
  }
  func.func @transform_17(%arg0: i32) -> (i32, i32, i32) {
    %c0_i32 = arith.constant 0 : i32
    %c0_i32_0 = arith.constant 0 : i32
    %c0_i32_1 = arith.constant 0 : i32
    %c0_i32_2 = arith.constant 0 : i32
    return %c0_i32, %c0_i32_0, %c0_i32_1 : i32, i32, i32
  }
  func.func @transform_18(%arg0: i32) -> (i32, i32, i32) {
    %c0_i32 = arith.constant 0 : i32
    %c0_i32_0 = arith.constant 0 : i32
    %c0_i32_1 = arith.constant 0 : i32
    return %arg0, %c0_i32, %c0_i32_0 : i32, i32, i32
  }
}

</mosaic_0001>

<llo_original>
// kernel: transformer_forward.1
$region0: #{transformer_forward.1}
  #allocation0 [shape = 'u32[]', space=smem, size = 0x4, offset = 0x4, fixed_abs, tag = 'smem constant byte address 0x4 - core index']
  #allocation1 [shape = 'u32[72,128]{1,0:T(1,128)}', space=vmem, size = 0x9000, scoped, tag = 'internal scratch']
  %s0 = inlined_call_operand.vmem [shape: bf16[32,8], index: 0, kind: input, shape index: {}]
  %s1 = inlined_call_operand.vmem [shape: f32[16,32], index: 1, kind: input, shape index: {}]
  %s2 = inlined_call_operand.vmem [shape: f32[16,64], index: 2, kind: input, shape index: {}]
  %s3 = inlined_call_operand.vmem [shape: f32[64,64], index: 3, kind: input, shape index: {}]
  %s4 = inlined_call_operand.vmem [shape: bf16[64,32], index: 4, kind: input, shape index: {}]
  %s5 = inlined_call_operand.vmem [shape: bf16[8,32], index: 5, kind: input, shape index: {}]
  %s6 = inlined_call_operand.vmem [shape: bf16[2,32,128], index: 6, kind: input, shape index: {}]
  %s7 = inlined_call_operand.vmem [shape: f32[2,1,128], index: 7, kind: input, shape index: {}]
  %s8 = inlined_call_operand.vmem [shape: bf16[2,32,32], index: 8, kind: input, shape index: {}]
  %s9 = inlined_call_operand.vmem [shape: f32[2,1,32], index: 9, kind: input, shape index: {}]
  %s10 = inlined_call_operand.hbm [shape: bf16[2,32,64], index: 10, kind: input, shape index: {}]
  %s11 = inlined_call_operand.vmem [shape: f32[2,1,64], index: 11, kind: input, shape index: {}]
  %s12 = inlined_call_operand.vmem [shape: bf16[2,64,32], index: 12, kind: input, shape index: {}]
  %s13 = inlined_call_operand.vmem [shape: f32[2,1,32], index: 13, kind: input, shape index: {}]
  %s14 = inlined_call_operand.vmem [shape: f32[2,1,32], index: 14, kind: input, shape index: {}]
  %s15 = inlined_call_operand.vmem [shape: f32[2,1,32], index: 15, kind: input, shape index: {}]
  %s16 = inlined_call_operand.vmem [shape: f32[2,1,32], index: 16, kind: input, shape index: {}]
  %s17 = inlined_call_operand.vmem [shape: f32[2,1,32], index: 17, kind: input, shape index: {}]
  %s18 = inlined_call_operand.vmem [shape: bf16[2,16,32], index: 18, kind: output, shape index: {}]
  %s19 = sld [smem:[#allocation0]]
  $region86: #{transformer_forward.1} parent=0
    _
  %s21 = ssub.s32 1, %s19
  %s22 = scalar_select 0, %s21, %s19
  $region1: #{transformer_forward.1} parent=0
    #allocation2 [shape = 'u8[16384]{0}', space=vmem, size = 0x4000, scoped, tag = 'input window, operand 10, single buffered']
    #allocation3 [shape = 's32[1]{0}', space=sflag, size = 0x4, scoped, tag = 'scoped memory for transformer_forward.1']
    %23 = vsyncpa [#allocation3], 0
    // Predicated region
    $region2: #{transformer_forward.1} parent=1 // pred_check
      _
    $region3: #{transformer_forward.1} parent=1 // pred_check_branch
      %25 = sbr.rel (0) target = $region5
    $region4: #{transformer_forward.1} parent=1 // pred_region
      _
    $region5: #{transformer_forward.1} parent=1 // pred_fallthru
      _
    // Predicated region
    $region6: #{transformer_forward.1} parent=1 // pred_check
      _
    $region7: #{transformer_forward.1} parent=1 // pred_check_branch
      %27 = sbr.rel (0) target = $region9
    $region8: #{transformer_forward.1} parent=1 // pred_region
      _
    $region9: #{transformer_forward.1} parent=1 // pred_fallthru
      _
    // Predicated region
    $region10: #{transformer_forward.1} parent=1 // pred_check
      _
    $region11: #{transformer_forward.1} parent=1 // pred_check_branch
      %29 = sbr.rel (0) target = $region13
    $region12: #{transformer_forward.1} parent=1 // pred_region
      _
    $region13: #{transformer_forward.1} parent=1 // pred_fallthru
      _
    // Predicated region
    $region14: #{transformer_forward.1} parent=1 // pred_check
      _
    $region15: #{transformer_forward.1} parent=1 // pred_check_branch
      %31 = sbr.rel (0) target = $region17
    $region16: #{transformer_forward.1} parent=1 // pred_region
      _
    $region17: #{transformer_forward.1} parent=1 // pred_fallthru
      _
    // Predicated region
    $region18: #{transformer_forward.1} parent=1 // pred_check
      _
    $region19: #{transformer_forward.1} parent=1 // pred_check_branch
      %33 = sbr.rel (0) target = $region21
    $region20: #{transformer_forward.1} parent=1 // pred_region
      _
    $region21: #{transformer_forward.1} parent=1 // pred_fallthru
      _
    // Predicated region
    $region22: #{transformer_forward.1} parent=1 // pred_check
      _
    $region23: #{transformer_forward.1} parent=1 // pred_check_branch
      %35 = sbr.rel (0) target = $region25
    $region24: #{transformer_forward.1} parent=1 // pred_region
      _
    $region25: #{transformer_forward.1} parent=1 // pred_fallthru
      _
    // Predicated region
    $region26: #{transformer_forward.1} parent=1 // pred_check
      _
    $region27: #{transformer_forward.1} parent=1 // pred_check_branch
      %37 = sbr.rel (0) target = $region29
    $region28: #{transformer_forward.1} parent=1 // pred_region
      _
    $region29: #{transformer_forward.1} parent=1 // pred_fallthru
      _
    // Predicated region
    $region30: #{transformer_forward.1} parent=1 // pred_check
      _
    $region31: #{transformer_forward.1} parent=1 // pred_check_branch
      %39 = sbr.rel (0) target = $region33
    $region32: #{transformer_forward.1} parent=1 // pred_region
      _
    $region33: #{transformer_forward.1} parent=1 // pred_fallthru
      _
    // Predicated region
    $region34: #{transformer_forward.1} parent=1 // pred_check
      _
    $region35: #{transformer_forward.1} parent=1 // pred_check_branch
      %41 = sbr.rel (0) target = $region37
    $region36: #{transformer_forward.1} parent=1 // pred_region
      _
    $region37: #{transformer_forward.1} parent=1 // pred_fallthru
      _
    // Predicated region
    $region38: #{transformer_forward.1} parent=1 // pred_check
      _
    $region39: #{transformer_forward.1} parent=1 // pred_check_branch
      %43 = sbr.rel (0) target = $region41
    $region40: #{transformer_forward.1} parent=1 // pred_region
      _
    $region41: #{transformer_forward.1} parent=1 // pred_fallthru
      _
    // Predicated region
    $region42: #{transformer_forward.1} parent=1 // pred_check
      _
    $region43: #{transformer_forward.1} parent=1 // pred_check_branch
      %45 = sbr.rel (0) target = $region45
    $region44: #{transformer_forward.1} parent=1 // pred_region
      %47 = vsyncadd [#allocation3], 0
      %s48 = sshll.u32 %s10, 4
      %s49 = int_to_ptr.hbm [resolvable:$true] %s48
      %s50 = sshll.u32 [#allocation2], 4
      %s51 = int_to_ptr.vmem [resolvable:$true] %s50
      %56 = dma.hbm_to_vmem [thread:$0]  %s49, 512, %s51, [#allocation3], 64, 64, 4
    $region45: #{transformer_forward.1} parent=1 // pred_fallthru
      _
    // Predicated region
    $region46: #{transformer_forward.1} parent=1 // pred_check
      _
    $region47: #{transformer_forward.1} parent=1 // pred_check_branch
      %58 = sbr.rel (0) target = $region49
    $region48: #{transformer_forward.1} parent=1 // pred_region
      _
    $region49: #{transformer_forward.1} parent=1 // pred_fallthru
      _
    // Predicated region
    $region50: #{transformer_forward.1} parent=1 // pred_check
      _
    $region51: #{transformer_forward.1} parent=1 // pred_check_branch
      %60 = sbr.rel (0) target = $region53
    $region52: #{transformer_forward.1} parent=1 // pred_region
      _
    $region53: #{transformer_forward.1} parent=1 // pred_fallthru
      _
    // Predicated region
    $region54: #{transformer_forward.1} parent=1 // pred_check
      _
    $region55: #{transformer_forward.1} parent=1 // pred_check_branch
      %62 = sbr.rel (0) target = $region57
    $region56: #{transformer_forward.1} parent=1 // pred_region
      _
    $region57: #{transformer_forward.1} parent=1 // pred_fallthru
      _
    // Predicated region
    $region58: #{transformer_forward.1} parent=1 // pred_check
      _
    $region59: #{transformer_forward.1} parent=1 // pred_check_branch
      %64 = sbr.rel (0) target = $region61
    $region60: #{transformer_forward.1} parent=1 // pred_region
      _
    $region61: #{transformer_forward.1} parent=1 // pred_fallthru
      _
    // Predicated region
    $region62: #{transformer_forward.1} parent=1 // pred_check
      _
    $region63: #{transformer_forward.1} parent=1 // pred_check_branch
      %66 = sbr.rel (0) target = $region65
    $region64: #{transformer_forward.1} parent=1 // pred_region
      _
    $region65: #{transformer_forward.1} parent=1 // pred_fallthru
      _
    // Predicated region
    $region66: #{transformer_forward.1} parent=1 // pred_check
      _
    $region67: #{transformer_forward.1} parent=1 // pred_check_branch
      %68 = sbr.rel (0) target = $region69
    $region68: #{transformer_forward.1} parent=1 // pred_region
      _
    $region69: #{transformer_forward.1} parent=1 // pred_fallthru
      _
    // Predicated region
    $region70: #{transformer_forward.1} parent=1 // pred_check
      _
    $region71: #{transformer_forward.1} parent=1 // pred_check_branch
      %70 = sbr.rel (0) target = $region73
    $region72: #{transformer_forward.1} parent=1 // pred_region
      _
    $region73: #{transformer_forward.1} parent=1 // pred_fallthru
      _
    // Predicated region
    $region74: #{transformer_forward.1} parent=1 // pred_check
      _
    $region75: #{transformer_forward.1} parent=1 // pred_check_branch
      %72 = sbr.rel (0) target = $region77
    $region76: #{transformer_forward.1} parent=1 // pred_region
      %74 = dma.done [#allocation3], 512
    $region77: #{transformer_forward.1} parent=1 // pred_fallthru
      _
    %v76 = vld [vmem:[%s0] sm:$0xf]
    %v77 = vld [vmem:[%s0 + $0x4] sm:$0xf]
    %v78 = vld [vmem:[%s0 + $0x8] sm:$0xf]
    %v79 = vld [vmem:[%s0 + $0xc] sm:$0xf]
    %v80 = vld [vmem:[%s5] sm:$0xf]
    %v85 = vunpack.c.l.b16 %v76
    %v86 = vunpack.c.l.b16 %v77
    %v87 = vunpack.c.l.b16 %v78
    %v88 = vunpack.c.l.b16 %v79
    %v89 = vpack.c.b16 %v86, %v85
    %v90 = vpack.c.b16 %v88, %v87
    %vm91 = vcmask 64512
    %v93 = vsel %vm91, %v89, 0
    %v96 = vsel %vm91, %v90, 0
    %vm98 = vcmask 1043456
    %v100 = vsel %vm98, %v80, 0
    %102 = vmatpush.bf16.msra.mxu0 0
    %103 = vmatpush.bf16.msra.mxu0 0
    %104 = vmatpush.bf16.msra.mxu0 0
    %105 = vmatpush.bf16.msra.mxu0 0
    %106 = vmatpush.bf16.msra.mxu0 0
    %107 = vmatpush.bf16.msra.mxu0 0
    %108 = vmatpush.bf16.msra.mxu0 0
    %109 = vmatpush.bf16.msra.mxu0 %v100
    %110 = vmatmul.bf16.gmra.mxu0 %v93
    %v111 = vpop.f32.mrf.mxu0
    %v112 = vadd.f32 0.0, %v111
    %v113 = vpop.f32.mrf.mxu0
    %v114 = vadd.f32 0.0, %v113
    %115 = vmatmul.bf16.gmra.mxu0 %v96
    %v116 = vpop.f32.mrf.mxu0
    %v117 = vadd.f32 0.0, %v116
    %v118 = vpop.f32.mrf.mxu0
    %v119 = vadd.f32 0.0, %v118
    %120 = vdwg.mxu0
    %v121 = vld [vmem:[%s1] sm:$0xff]
    %v122 = vld [vmem:[%s1 + $0x8] sm:$0xff]
    %v123 = vadd.f32 %v112, %v121
    %v124 = vadd.f32 %v114, %v122
    %v125 = vadd.f32 %v117, %v121
    %v126 = vadd.f32 %v119, %v122
    %v127 = vld [vmem:[%s2] sm:$0xff]
    %v128 = vld [vmem:[%s2 + $0x8] sm:$0xff]
    %v129 = vld [vmem:[%s4] sm:$0xf]
    %v130 = vld [vmem:[%s4 + $0x4] sm:$0xf]
    %v131 = vld [vmem:[%s4 + $0x8] sm:$0xf]
    %v132 = vld [vmem:[%s4 + $0xc] sm:$0xf]
    %v133 = vld [vmem:[%s4 + $0x10] sm:$0xf]
    %v134 = vld [vmem:[%s4 + $0x14] sm:$0xf]
    %v135 = vld [vmem:[%s4 + $0x18] sm:$0xf]
    %v136 = vld [vmem:[%s4 + $0x1c] sm:$0xf]
    %v137 = vld [vmem:[%s3] sm:$0xff]
    %v138 = vld [vmem:[%s3 + $0x8] sm:$0xff]
    %v139 = vld [vmem:[%s3 + $0x10] sm:$0xff]
    %v140 = vld [vmem:[%s3 + $0x18] sm:$0xff]
    %v141 = vld [vmem:[%s3 + $0x20] sm:$0xff]
    %v142 = vld [vmem:[%s3 + $0x28] sm:$0xff]
    %v143 = vld [vmem:[%s3 + $0x30] sm:$0xff]
    %v144 = vld [vmem:[%s3 + $0x38] sm:$0xff]
    %v145 = vpack.c.bf16 %v124, %v123
    %v146 = vpack.c.bf16 %v126, %v125
    %v147 = vld [vmem:[%s6] sm:$0xf]
    %v148 = vld [vmem:[%s6 + $0x4] sm:$0xf]
    %v149 = vld [vmem:[%s6 + $0x8] sm:$0xf]
    %v150 = vld [vmem:[%s6 + $0xc] sm:$0xf]
    %v151 = vld [vmem:[%s7] sm:$0x1]
    %v153 = vperm.slane %v151, 0
    %v159 = vunpack.c.l.b16 %v147
    %v160 = vunpack.c.l.b16 %v148
    %v161 = vunpack.c.l.b16 %v149
    %v162 = vunpack.c.l.b16 %v150
    %v163 = vpack.c.b16 %v160, %v159
    %v164 = vpack.c.b16 %v162, %v161
    %vm167 = vcmask 261120
    %v169 = vsel %vm167, %v145, 0
    %v172 = vsel %vm167, %v146, 0
    %174 = vmatpush.bf16.msra.mxu0 0
    %175 = vmatpush.bf16.msra.mxu0 0
    %176 = vmatpush.bf16.msra.mxu0 0
    %177 = vmatpush.bf16.msra.mxu0 0
    %178 = vmatpush.bf16.msra.mxu0 0
    %179 = vmatpush.bf16.msra.mxu0 0
    %180 = vmatpush.bf16.msra.mxu0 %v164
    %181 = vmatpush.bf16.msra.mxu0 %v163
    %182 = vmatmul.bf16.gmra.mxu0 %v169
    %v183 = vpop.f32.mrf.mxu0
    %v184 = vadd.f32 %v153, %v183
    %v185 = vpop.f32.mrf.mxu0
    %v186 = vadd.f32 %v153, %v185
    %187 = vmatmul.bf16.gmra.mxu0 %v172
    %v188 = vpop.f32.mrf.mxu0
    %v189 = vadd.f32 %v153, %v188
    %v190 = vpop.f32.mrf.mxu0
    %v191 = vadd.f32 %v153, %v190
    %192 = vdwg.mxu0
    %v193 = vpack.c.bf16 %v184, %v184
    %v194 = vpack.c.bf16 %v186, %v186
    %v195 = vpack.c.bf16 %v189, %v189
    %v196 = vpack.c.bf16 %v191, %v191
    %v201 = vunpack.c.l.b16 %v193
    %v202 = vunpack.c.l.b16 %v194
    %v203 = vunpack.c.l.b16 %v195
    %v204 = vunpack.c.l.b16 %v196
    %v205 = vpack.c.b16 %v202, %v201
    %v206 = vpack.c.b16 %v204, %v203
    %v209 = vunpack.c.l.bf16 %v205
    %v210 = vunpack.c.h.bf16 %v205
    %v211 = vunpack.c.l.bf16 %v206
    %v212 = vunpack.c.h.bf16 %v206
    %v213 = vunpack.c.l.bf16 %v129
    %v214 = vunpack.c.l.bf16 %v130
    %v215 = vunpack.c.l.bf16 %v131
    %v216 = vunpack.c.l.bf16 %v132
    %v217 = vunpack.c.l.bf16 %v133
    %v218 = vunpack.c.l.bf16 %v134
    %v219 = vunpack.c.l.bf16 %v135
    %v220 = vunpack.c.l.bf16 %v136
    %229 = vrot.lane.b32.xlu0 %v213, 32
    %v230 = vpop.permute.xlu0 %229
    %231 = vrot.lane.b32.xlu0 %v214, 32
    %v232 = vpop.permute.xlu0 %231
    %233 = vrot.lane.b32.xlu0 %v215, 32
    %v234 = vpop.permute.xlu0 %233
    %235 = vrot.lane.b32.xlu0 %v216, 32
    %v236 = vpop.permute.xlu0 %235
    %237 = vrot.lane.b32.xlu0 %v217, 32
    %v238 = vpop.permute.xlu0 %237
    %239 = vrot.lane.b32.xlu0 %v218, 32
    %v240 = vpop.permute.xlu0 %239
    %241 = vrot.lane.b32.xlu0 %v219, 32
    %v242 = vpop.permute.xlu0 %241
    %243 = vrot.lane.b32.xlu0 %v220, 32
    %v244 = vpop.permute.xlu0 %243
    %v253 = vmul.f32 %v209, %v230
    %v254 = vmul.f32 %v210, %v232
    %v255 = vmul.f32 %v209, %v234
    %v256 = vmul.f32 %v210, %v236
    %v257 = vmul.f32 %v209, %v238
    %v258 = vmul.f32 %v210, %v240
    %v259 = vmul.f32 %v209, %v242
    %v260 = vmul.f32 %v210, %v244
    %v261 = vmul.f32 %v211, %v230
    %v262 = vmul.f32 %v212, %v232
    %v263 = vmul.f32 %v211, %v234
    %v264 = vmul.f32 %v212, %v236
    %v265 = vmul.f32 %v211, %v238
    %v266 = vmul.f32 %v212, %v240
    %v267 = vmul.f32 %v211, %v242
    %v268 = vmul.f32 %v212, %v244
    %v269 = vpack.c.bf16 %v253, %v253
    %v270 = vpack.c.bf16 %v254, %v254
    %v271 = vpack.c.bf16 %v255, %v255
    %v272 = vpack.c.bf16 %v256, %v256
    %v273 = vpack.c.bf16 %v257, %v257
    %v274 = vpack.c.bf16 %v258, %v258
    %v275 = vpack.c.bf16 %v259, %v259
    %v276 = vpack.c.bf16 %v260, %v260
    %v277 = vpack.c.bf16 %v261, %v261
    %v278 = vpack.c.bf16 %v262, %v262
    %v279 = vpack.c.bf16 %v263, %v263
    %v280 = vpack.c.bf16 %v264, %v264
    %v281 = vpack.c.bf16 %v265, %v265
    %v282 = vpack.c.bf16 %v266, %v266
    %v283 = vpack.c.bf16 %v267, %v267
    %v284 = vpack.c.bf16 %v268, %v268
    %285 = vrot.lane.b32.xlu0 %v213, 64
    %v286 = vpop.permute.xlu0 %285
    %287 = vrot.lane.b32.xlu0 %v214, 64
    %v288 = vpop.permute.xlu0 %287
    %289 = vrot.lane.b32.xlu0 %v215, 64
    %v290 = vpop.permute.xlu0 %289
    %291 = vrot.lane.b32.xlu0 %v216, 64
    %v292 = vpop.permute.xlu0 %291
    %293 = vrot.lane.b32.xlu0 %v217, 64
    %v294 = vpop.permute.xlu0 %293
    %295 = vrot.lane.b32.xlu0 %v218, 64
    %v296 = vpop.permute.xlu0 %295
    %297 = vrot.lane.b32.xlu0 %v219, 64
    %v298 = vpop.permute.xlu0 %297
    %299 = vrot.lane.b32.xlu0 %v220, 64
    %v300 = vpop.permute.xlu0 %299
    %v309 = vmul.f32 %v209, %v286
    %v310 = vmul.f32 %v210, %v288
    %v311 = vmul.f32 %v209, %v290
    %v312 = vmul.f32 %v210, %v292
    %v313 = vmul.f32 %v209, %v294
    %v314 = vmul.f32 %v210, %v296
    %v315 = vmul.f32 %v209, %v298
    %v316 = vmul.f32 %v210, %v300
    %v317 = vmul.f32 %v211, %v286
    %v318 = vmul.f32 %v212, %v288
    %v319 = vmul.f32 %v211, %v290
    %v320 = vmul.f32 %v212, %v292
    %v321 = vmul.f32 %v211, %v294
    %v322 = vmul.f32 %v212, %v296
    %v323 = vmul.f32 %v211, %v298
    %v324 = vmul.f32 %v212, %v300
    %v325 = vpack.c.bf16 %v309, %v309
    %v326 = vpack.c.bf16 %v310, %v310
    %v327 = vpack.c.bf16 %v311, %v311
    %v328 = vpack.c.bf16 %v312, %v312
    %v329 = vpack.c.bf16 %v313, %v313
    %v330 = vpack.c.bf16 %v314, %v314
    %v331 = vpack.c.bf16 %v315, %v315
    %v332 = vpack.c.bf16 %v316, %v316
    %v333 = vpack.c.bf16 %v317, %v317
    %v334 = vpack.c.bf16 %v318, %v318
    %v335 = vpack.c.bf16 %v319, %v319
    %v336 = vpack.c.bf16 %v320, %v320
    %v337 = vpack.c.bf16 %v321, %v321
    %v338 = vpack.c.bf16 %v322, %v322
    %v339 = vpack.c.bf16 %v323, %v323
    %v340 = vpack.c.bf16 %v324, %v324
    %v349 = vunpack.c.l.b16 %v269
    %v350 = vunpack.c.l.b16 %v270
    %v351 = vunpack.c.l.b16 %v271
    %v352 = vunpack.c.l.b16 %v272
    %v353 = vunpack.c.l.b16 %v273
    %v354 = vunpack.c.l.b16 %v274
    %v355 = vunpack.c.l.b16 %v275
    %v356 = vunpack.c.l.b16 %v276
    %v357 = vpack.c.b16 %v350, %v349
    %v358 = vpack.c.b16 %v352, %v351
    %v359 = vpack.c.b16 %v354, %v353
    %v360 = vpack.c.b16 %v356, %v355
    %361 = vrot.lane.b32.xlu0 %v357, 96
    %v362 = vpop.permute.xlu0 %361
    %363 = vrot.lane.b32.xlu0 %v358, 96
    %v364 = vpop.permute.xlu0 %363
    %365 = vrot.lane.b32.xlu0 %v359, 96
    %v366 = vpop.permute.xlu0 %365
    %367 = vrot.lane.b32.xlu0 %v360, 96
    %v368 = vpop.permute.xlu0 %367
    %v370 = vsel %vm167, %v205, 0
    %v373 = vsel %vm167, %v362, 0
    %v376 = vsel %vm167, %v364, 0
    %v379 = vsel %vm167, %v366, 0
    %v382 = vsel %vm167, %v368, 0
    %384 = vmatpush.bf16.xpose.msra.mxu0 0
    %385 = vmatpush.bf16.xpose.msra.mxu0 0
    %386 = vmatpush.bf16.xpose.msra.mxu0 0
    %387 = vmatpush.bf16.xpose.msra.mxu0 0
    %388 = vmatpush.bf16.xpose.msra.mxu0 %v382
    %389 = vmatpush.bf16.xpose.msra.mxu0 %v379
    %390 = vmatpush.bf16.xpose.msra.mxu0 %v376
    %391 = vmatpush.bf16.xpose.msra.mxu0 %v373
    %392 = vmatmul.bf16.gmra.mxu0 %v370
    %v393 = vpop.f32.mrf.mxu0
    %v394 = vadd.f32 %v127, %v393
    %v395 = vpop.f32.mrf.mxu0
    %v396 = vadd.f32 %v128, %v395
    %397 = vdwg.mxu0
    %v406 = vunpack.c.l.b16 %v277
    %v407 = vunpack.c.l.b16 %v278
    %v408 = vunpack.c.l.b16 %v279
    %v409 = vunpack.c.l.b16 %v280
    %v410 = vunpack.c.l.b16 %v281
    %v411 = vunpack.c.l.b16 %v282
    %v412 = vunpack.c.l.b16 %v283
    %v413 = vunpack.c.l.b16 %v284
    %v414 = vpack.c.b16 %v407, %v406
    %v415 = vpack.c.b16 %v409, %v408
    %v416 = vpack.c.b16 %v411, %v410
    %v417 = vpack.c.b16 %v413, %v412
    %418 = vrot.lane.b32.xlu0 %v414, 96
    %v419 = vpop.permute.xlu0 %418
    %420 = vrot.lane.b32.xlu0 %v415, 96
    %v421 = vpop.permute.xlu0 %420
    %422 = vrot.lane.b32.xlu0 %v416, 96
    %v423 = vpop.permute.xlu0 %422
    %424 = vrot.lane.b32.xlu0 %v417, 96
    %v425 = vpop.permute.xlu0 %424
    %v427 = vsel %vm167, %v206, 0
    %v430 = vsel %vm167, %v419, 0
    %v433 = vsel %vm167, %v421, 0
    %v436 = vsel %vm167, %v423, 0
    %v439 = vsel %vm167, %v425, 0
    %441 = vmatpush.bf16.xpose.msra.mxu0 0
    %442 = vmatpush.bf16.xpose.msra.mxu0 0
    %443 = vmatpush.bf16.xpose.msra.mxu0 0
    %444 = vmatpush.bf16.xpose.msra.mxu0 0
    %445 = vmatpush.bf16.xpose.msra.mxu0 %v439
    %446 = vmatpush.bf16.xpose.msra.mxu0 %v436
    %447 = vmatpush.bf16.xpose.msra.mxu0 %v433
    %448 = vmatpush.bf16.xpose.msra.mxu0 %v430
    %449 = vmatmul.bf16.gmra.mxu0 %v427
    %v450 = vpop.f32.mrf.mxu0
    %v451 = vadd.f32 %v127, %v450
    %v452 = vpop.f32.mrf.mxu0
    %v453 = vadd.f32 %v128, %v452
    %454 = vdwg.mxu0
    %vm455 = vcmask 523264
    %v456 = vsel %vm455, %v394, -inf
    %457 = vmax.xlane.f32.xlu0 %v456
    %v458 = vpop.xlane.xlu0 %457
    %v459 = vsel %vm455, %v396, -inf
    %460 = vmax.xlane.f32.xlu0 %v459
    %v461 = vpop.xlane.xlu0 %460
    %v462 = vsel %vm455, %v451, -inf
    %463 = vmax.xlane.f32.xlu0 %v462
    %v464 = vpop.xlane.xlu0 %463
    %v465 = vsel %vm455, %v453, -inf
    %466 = vmax.xlane.f32.xlu0 %v465
    %v467 = vpop.xlane.xlu0 %466
    %v468 = vsub.f32 %v394, %v458
    %v469 = vsub.f32 %v396, %v461
    %v470 = vsub.f32 %v451, %v464
    %v471 = vsub.f32 %v453, %v467
    %v472 = vmul.f32 %v468, 1.442695
    %v473 = vpow.pop %v472
    %v474 = vmul.f32 %v469, 1.442695
    %v475 = vpow.pop %v474
    %v476 = vmul.f32 %v470, 1.442695
    %v477 = vpow.pop %v476
    %v478 = vmul.f32 %v471, 1.442695
    %v479 = vpow.pop %v478
    %v481 = vsel %vm455, %v473, 0
    %v484 = vsel %vm455, %v475, 0
    %v487 = vsel %vm455, %v477, 0
    %v490 = vsel %vm455, %v479, 0
    %492 = vmatpush.msra.mxu0 0.0
    %493 = vmatpush.msra.mxu0 0.0
    %494 = vmatpush.msra.mxu0 0.0
    %495 = vmatpush.msra.mxu0 0.0
    %496 = vmatpush.msra.mxu0 0.0
    %497 = vmatpush.msra.mxu0 0.0
    %498 = vmatpush.msra.mxu0 0.0
    %499 = vmatpush.msra.mxu0 0.0
    %500 = vmatpush.msra.mxu0 %v144
    %501 = vmatpush.msra.mxu0 %v143
    %502 = vmatpush.msra.mxu0 %v142
    %503 = vmatpush.msra.mxu0 %v141
    %504 = vmatpush.msra.mxu0 %v140
    %505 = vmatpush.msra.mxu0 %v139
    %506 = vmatpush.msra.mxu0 %v138
    %507 = vmatpush.msra.mxu0 %v137
    %508 = vmatmul.f32.gmra.mxu0 %v481
    %v509 = vpop.f32.mrf.mxu0
    %v510 = vadd.f32 0.0, %v509
    %511 = vmatmul.f32.gmra.mxu0 %v484
    %v512 = vpop.f32.mrf.mxu0
    %v513 = vadd.f32 0.0, %v512
    %514 = vmatmul.f32.gmra.mxu0 %v487
    %v515 = vpop.f32.mrf.mxu0
    %v516 = vadd.f32 0.0, %v515
    %517 = vmatmul.f32.gmra.mxu0 %v490
    %v518 = vpop.f32.mrf.mxu0
    %v519 = vadd.f32 0.0, %v518
    %520 = vdwg.mxu0
    %v521 = vrcp.pop %v510
    %v522 = vrcp.pop %v513
    %v523 = vrcp.pop %v516
    %v524 = vrcp.pop %v519
    %v525 = vmul.f32 %v473, %v521
    %v526 = vmul.f32 %v475, %v522
    %v527 = vmul.f32 %v477, %v523
    %v528 = vmul.f32 %v479, %v524
    %v529 = vpack.c.bf16 %v525, %v525
    %v530 = vpack.c.bf16 %v526, %v526
    %v531 = vpack.c.bf16 %v527, %v527
    %v532 = vpack.c.bf16 %v528, %v528
    %v535 = vunpack.c.l.b16 %v529
    %v536 = vunpack.c.l.b16 %v530
    %v537 = vpack.c.b16 %v536, %v535
    %v546 = vunpack.c.l.b16 %v325
    %v547 = vunpack.c.l.b16 %v326
    %v548 = vunpack.c.l.b16 %v327
    %v549 = vunpack.c.l.b16 %v328
    %v550 = vunpack.c.l.b16 %v329
    %v551 = vunpack.c.l.b16 %v330
    %v552 = vunpack.c.l.b16 %v331
    %v553 = vunpack.c.l.b16 %v332
    %v554 = vpack.c.b16 %v547, %v546
    %v555 = vpack.c.b16 %v549, %v548
    %v556 = vpack.c.b16 %v551, %v550
    %v557 = vpack.c.b16 %v553, %v552
    %558 = vrot.lane.b32.xlu0 %v554, 64
    %v559 = vpop.permute.xlu0 %558
    %560 = vrot.lane.b32.xlu0 %v555, 64
    %v561 = vpop.permute.xlu0 %560
    %562 = vrot.lane.b32.xlu0 %v556, 64
    %v563 = vpop.permute.xlu0 %562
    %564 = vrot.lane.b32.xlu0 %v557, 64
    %v565 = vpop.permute.xlu0 %564
    %v571 = vsel %vm455, %v537, 0
    %573 = vmatpush.bf16.msra.mxu0 0
    %574 = vmatpush.bf16.msra.mxu0 0
    %575 = vmatpush.bf16.msra.mxu0 0
    %576 = vmatpush.bf16.msra.mxu0 0
    %577 = vmatpush.bf16.msra.mxu0 %v565
    %578 = vmatpush.bf16.msra.mxu0 %v563
    %579 = vmatpush.bf16.msra.mxu0 %v561
    %580 = vmatpush.bf16.msra.mxu0 %v559
    %581 = vmatmul.bf16.gmra.mxu0 %v571
    %v582 = vpop.f32.mrf.mxu0
    %v583 = vadd.f32 0.0, %v582
    %v584 = vpop.f32.mrf.mxu0
    %v585 = vadd.f32 0.0, %v584
    %586 = vdwg.mxu0
    %v589 = vunpack.c.l.b16 %v531
    %v590 = vunpack.c.l.b16 %v532
    %v591 = vpack.c.b16 %v590, %v589
    %v600 = vunpack.c.l.b16 %v333
    %v601 = vunpack.c.l.b16 %v334
    %v602 = vunpack.c.l.b16 %v335
    %v603 = vunpack.c.l.b16 %v336
    %v604 = vunpack.c.l.b16 %v337
    %v605 = vunpack.c.l.b16 %v338
    %v606 = vunpack.c.l.b16 %v339
    %v607 = vunpack.c.l.b16 %v340
    %v608 = vpack.c.b16 %v601, %v600
    %v609 = vpack.c.b16 %v603, %v602
    %v610 = vpack.c.b16 %v605, %v604
    %v611 = vpack.c.b16 %v607, %v606
    %612 = vrot.lane.b32.xlu0 %v608, 64
    %v613 = vpop.permute.xlu0 %612
    %614 = vrot.lane.b32.xlu0 %v609, 64
    %v615 = vpop.permute.xlu0 %614
    %616 = vrot.lane.b32.xlu0 %v610, 64
    %v617 = vpop.permute.xlu0 %616
    %618 = vrot.lane.b32.xlu0 %v611, 64
    %v619 = vpop.permute.xlu0 %618
    %v625 = vsel %vm455, %v591, 0
    %627 = vmatpush.bf16.msra.mxu0 0
    %628 = vmatpush.bf16.msra.mxu0 0
    %629 = vmatpush.bf16.msra.mxu0 0
    %630 = vmatpush.bf16.msra.mxu0 0
    %631 = vmatpush.bf16.msra.mxu0 %v619
    %632 = vmatpush.bf16.msra.mxu0 %v617
    %633 = vmatpush.bf16.msra.mxu0 %v615
    %634 = vmatpush.bf16.msra.mxu0 %v613
    %635 = vmatmul.bf16.gmra.mxu0 %v625
    %v636 = vpop.f32.mrf.mxu0
    %v637 = vadd.f32 0.0, %v636
    %v638 = vpop.f32.mrf.mxu0
    %v639 = vadd.f32 0.0, %v638
    %640 = vdwg.mxu0
    %v641 = vpack.c.bf16 %v585, %v583
    %v642 = vpack.c.bf16 %v639, %v637
    %v643 = vld [vmem:[%s8] sm:$0xf]
    %v644 = vld [vmem:[%s8 + $0x4] sm:$0xf]
    %v645 = vld [vmem:[%s8 + $0x8] sm:$0xf]
    %v646 = vld [vmem:[%s8 + $0xc] sm:$0xf]
    %v651 = vunpack.c.l.b16 %v643
    %v652 = vunpack.c.l.b16 %v644
    %v653 = vunpack.c.l.b16 %v645
    %v654 = vunpack.c.l.b16 %v646
    %v655 = vpack.c.b16 %v652, %v651
    %v656 = vpack.c.b16 %v654, %v653
    %v660 = vsel %vm167, %v641, 0
    %v663 = vsel %vm167, %v642, 0
    %665 = vmatpush.bf16.msra.mxu0 0
    %666 = vmatpush.bf16.msra.mxu0 0
    %667 = vmatpush.bf16.msra.mxu0 0
    %668 = vmatpush.bf16.msra.mxu0 0
    %669 = vmatpush.bf16.msra.mxu0 0
    %670 = vmatpush.bf16.msra.mxu0 0
    %671 = vmatpush.bf16.msra.mxu0 %v656
    %672 = vmatpush.bf16.msra.mxu0 %v655
    %673 = vmatmul.bf16.gmra.mxu0 %v660
    %v674 = vpop.f32.mrf.mxu0
    %v675 = vadd.f32 0.0, %v674
    %v676 = vpop.f32.mrf.mxu0
    %v677 = vadd.f32 0.0, %v676
    %678 = vmatmul.bf16.gmra.mxu0 %v663
    %v679 = vpop.f32.mrf.mxu0
    %v680 = vadd.f32 0.0, %v679
    %v681 = vpop.f32.mrf.mxu0
    %v682 = vadd.f32 0.0, %v681
    %683 = vdwg.mxu0
    %v684 = vadd.f32 %v123, %v675
    %v685 = vadd.f32 %v124, %v677
    %v686 = vadd.f32 %v125, %v680
    %v687 = vadd.f32 %v126, %v682
    %v688 = vld [vmem:[%s9] sm:$0x1]
    %v690 = vperm.slane %v688, 0
    %v692 = vadd.f32 %v684, %v690
    %v693 = vadd.f32 %v685, %v690
    %v694 = vadd.f32 %v686, %v690
    %v695 = vadd.f32 %v687, %v690
    %v696 = vld [vmem:[%s14] sm:$0x1]
    %v697 = vld [vmem:[%s15] sm:$0x1]
    %v698 = vsel %vm167, %v692, 0.0
    %699 = vadd.xlane.f32.xlu0 %v698
    %v700 = vpop.xlane.xlu0 %699
    %v701 = vsel %vm167, %v693, 0.0
    %702 = vadd.xlane.f32.xlu0 %v701
    %v703 = vpop.xlane.xlu0 %702
    %v704 = vsel %vm167, %v694, 0.0
    %705 = vadd.xlane.f32.xlu0 %v704
    %v706 = vpop.xlane.xlu0 %705
    %v707 = vsel %vm167, %v695, 0.0
    %708 = vadd.xlane.f32.xlu0 %v707
    %v709 = vpop.xlane.xlu0 %708
    %v710 = vrcp.pop 32.0
    %v711 = vmul.f32 32.0, %v710
    %v712 = vsub.f32 1.0, %v711
    %v713 = vmul.f32 %v710, %v712
    %v714 = vadd.f32 %v710, %v713
    %vm715 = vweird.f32 %v710
    %v716 = vsel %vm715, %v710, %v714
    %v717 = vmul.f32 %v700, %v716
    %v718 = vmul.f32 %v703, %v716
    %v719 = vmul.f32 %v706, %v716
    %v720 = vmul.f32 %v709, %v716
    %v721 = vsub.f32 %v692, %v717
    %v722 = vsub.f32 %v693, %v718
    %v723 = vsub.f32 %v694, %v719
    %v724 = vsub.f32 %v695, %v720
    %v725 = vmul.f32 %v721, %v721
    %v726 = vmul.f32 %v722, %v722
    %v727 = vmul.f32 %v723, %v723
    %v728 = vmul.f32 %v724, %v724
    %v729 = vsel %vm167, %v725, 0.0
    %730 = vadd.xlane.f32.xlu0 %v729
    %v731 = vpop.xlane.xlu0 %730
    %v732 = vsel %vm167, %v726, 0.0
    %733 = vadd.xlane.f32.xlu0 %v732
    %v734 = vpop.xlane.xlu0 %733
    %v735 = vsel %vm167, %v727, 0.0
    %736 = vadd.xlane.f32.xlu0 %v735
    %v737 = vpop.xlane.xlu0 %736
    %v738 = vsel %vm167, %v728, 0.0
    %739 = vadd.xlane.f32.xlu0 %v738
    %v740 = vpop.xlane.xlu0 %739
    %v741 = vmul.f32 %v731, %v716
    %v742 = vmul.f32 %v734, %v716
    %v743 = vmul.f32 %v737, %v716
    %v744 = vmul.f32 %v740, %v716
    %v745 = vadd.f32 %v741, 1e-05
    %v746 = vadd.f32 %v742, 1e-05
    %v747 = vadd.f32 %v743, 1e-05
    %v748 = vadd.f32 %v744, 1e-05
    %v749 = vrsqrt.pop %v745
    %v750 = vmul.f32 %v749, %v745
    %v751 = vmul.f32 %v750, %v749
    %v752 = vmul.f32 0.5, %v751
    %v753 = vsub.f32 1.5, %v752
    %v754 = vmul.f32 %v749, %v753
    %vm755 = vweird.f32 %v745
    %vm756 = vweird.f32 %v749
    %vm757 = vmor %vm755, %vm756
    %v758 = vsel %vm757, %v749, %v754
    %v759 = vrsqrt.pop %v746
    %v760 = vmul.f32 %v759, %v746
    %v761 = vmul.f32 %v760, %v759
    %v762 = vmul.f32 0.5, %v761
    %v763 = vsub.f32 1.5, %v762
    %v764 = vmul.f32 %v759, %v763
    %vm765 = vweird.f32 %v746
    %vm766 = vweird.f32 %v759
    %vm767 = vmor %vm765, %vm766
    %v768 = vsel %vm767, %v759, %v764
    %v769 = vrsqrt.pop %v747
    %v770 = vmul.f32 %v769, %v747
    %v771 = vmul.f32 %v770, %v769
    %v772 = vmul.f32 0.5, %v771
    %v773 = vsub.f32 1.5, %v772
    %v774 = vmul.f32 %v769, %v773
    %vm775 = vweird.f32 %v747
    %vm776 = vweird.f32 %v769
    %vm777 = vmor %vm775, %vm776
    %v778 = vsel %vm777, %v769, %v774
    %v779 = vrsqrt.pop %v748
    %v780 = vmul.f32 %v779, %v748
    %v781 = vmul.f32 %v780, %v779
    %v782 = vmul.f32 0.5, %v781
    %v783 = vsub.f32 1.5, %v782
    %v784 = vmul.f32 %v779, %v783
    %vm785 = vweird.f32 %v748
    %vm786 = vweird.f32 %v779
    %vm787 = vmor %vm785, %vm786
    %v788 = vsel %vm787, %v779, %v784
    %v789 = vmul.f32 %v721, %v758
    %v790 = vmul.f32 %v722, %v768
    %v791 = vmul.f32 %v723, %v778
    %v792 = vmul.f32 %v724, %v788
    %v794 = vperm.slane %v696, 0
    %v796 = vmul.f32 %v789, %v794
    %v797 = vmul.f32 %v790, %v794
    %v798 = vmul.f32 %v791, %v794
    %v799 = vmul.f32 %v792, %v794
    %v801 = vperm.slane %v697, 0
    %v803 = vadd.f32 %v796, %v801
    %v804 = vadd.f32 %v797, %v801
    %v805 = vadd.f32 %v798, %v801
    %v806 = vadd.f32 %v799, %v801
    %v807 = vpack.c.bf16 %v804, %v803
    %v808 = vpack.c.bf16 %v806, %v805
    %v809 = vld [vmem:[#allocation2] sm:$0xf]
    %v810 = vld [vmem:[#allocation2 + $0x4] sm:$0xf]
    %v811 = vld [vmem:[#allocation2 + $0x8] sm:$0xf]
    %v812 = vld [vmem:[#allocation2 + $0xc] sm:$0xf]
    %v813 = vld [vmem:[%s11] sm:$0x1]
    %v815 = vperm.slane %v813, 0
    %v821 = vunpack.c.l.b16 %v809
    %v822 = vunpack.c.l.b16 %v810
    %v823 = vunpack.c.l.b16 %v811
    %v824 = vunpack.c.l.b16 %v812
    %v825 = vpack.c.b16 %v822, %v821
    %v826 = vpack.c.b16 %v824, %v823
    %v830 = vsel %vm167, %v807, 0
    %v833 = vsel %vm167, %v808, 0
    %835 = vmatpush.bf16.msra.mxu0 0
    %836 = vmatpush.bf16.msra.mxu0 0
    %837 = vmatpush.bf16.msra.mxu0 0
    %838 = vmatpush.bf16.msra.mxu0 0
    %839 = vmatpush.bf16.msra.mxu0 0
    %840 = vmatpush.bf16.msra.mxu0 0
    %841 = vmatpush.bf16.msra.mxu0 %v826
    %842 = vmatpush.bf16.msra.mxu0 %v825
    %843 = vmatmul.bf16.gmra.mxu0 %v830
    %v844 = vpop.f32.mrf.mxu0
    %v845 = vadd.f32 %v815, %v844
    %v846 = vpop.f32.mrf.mxu0
    %v847 = vadd.f32 %v815, %v846
    %848 = vmatmul.bf16.gmra.mxu0 %v833
    %v849 = vpop.f32.mrf.mxu0
    %v850 = vadd.f32 %v815, %v849
    %v851 = vpop.f32.mrf.mxu0
    %v852 = vadd.f32 %v815, %v851
    %853 = vdwg.mxu0
    %v854 = vmax.f32 %v845, 0.0
    %v855 = vmax.f32 %v847, 0.0
    %v856 = vmax.f32 %v850, 0.0
    %v857 = vmax.f32 %v852, 0.0
    %v858 = vpack.c.bf16 %v855, %v854
    %v859 = vpack.c.bf16 %v857, %v856
    %v860 = vld [vmem:[%s12] sm:$0xf]
    %v861 = vld [vmem:[%s12 + $0x4] sm:$0xf]
    %v862 = vld [vmem:[%s12 + $0x8] sm:$0xf]
    %v863 = vld [vmem:[%s12 + $0xc] sm:$0xf]
    %v864 = vld [vmem:[%s12 + $0x10] sm:$0xf]
    %v865 = vld [vmem:[%s12 + $0x14] sm:$0xf]
    %v866 = vld [vmem:[%s12 + $0x18] sm:$0xf]
    %v867 = vld [vmem:[%s12 + $0x1c] sm:$0xf]
    %v868 = vld [vmem:[%s13] sm:$0x1]
    %v870 = vperm.slane %v868, 0
    %v880 = vunpack.c.l.b16 %v860
    %v881 = vunpack.c.l.b16 %v861
    %v882 = vunpack.c.l.b16 %v862
    %v883 = vunpack.c.l.b16 %v863
    %v884 = vunpack.c.l.b16 %v864
    %v885 = vunpack.c.l.b16 %v865
    %v886 = vunpack.c.l.b16 %v866
    %v887 = vunpack.c.l.b16 %v867
    %v888 = vpack.c.b16 %v881, %v880
    %v889 = vpack.c.b16 %v883, %v882
    %v890 = vpack.c.b16 %v885, %v884
    %v891 = vpack.c.b16 %v887, %v886
    %v897 = vsel %vm455, %v858, 0
    %v900 = vsel %vm455, %v859, 0
    %902 = vmatpush.bf16.msra.mxu0 0
    %903 = vmatpush.bf16.msra.mxu0 0
    %904 = vmatpush.bf16.msra.mxu0 0
    %905 = vmatpush.bf16.msra.mxu0 0
    %906 = vmatpush.bf16.msra.mxu0 %v891
    %907 = vmatpush.bf16.msra.mxu0 %v890
    %908 = vmatpush.bf16.msra.mxu0 %v889
    %909 = vmatpush.bf16.msra.mxu0 %v888
    %910 = vmatmul.bf16.gmra.mxu0 %v897
    %v911 = vpop.f32.mrf.mxu0
    %v912 = vadd.f32 %v870, %v911
    %v913 = vpop.f32.mrf.mxu0
    %v914 = vadd.f32 %v870, %v913
    %915 = vmatmul.bf16.gmra.mxu0 %v900
    %v916 = vpop.f32.mrf.mxu0
    %v917 = vadd.f32 %v870, %v916
    %v918 = vpop.f32.mrf.mxu0
    %v919 = vadd.f32 %v870, %v918
    %920 = vdwg.mxu0
    %v921 = vadd.f32 %v803, %v912
    %v922 = vadd.f32 %v804, %v914
    %v923 = vadd.f32 %v805, %v917
    %v924 = vadd.f32 %v806, %v919
    %v925 = vld [vmem:[%s16] sm:$0x1]
    %v926 = vld [vmem:[%s17] sm:$0x1]
    %v927 = vsel %vm167, %v921, 0.0
    %928 = vadd.xlane.f32.xlu0 %v927
    %v929 = vpop.xlane.xlu0 %928
    %v930 = vsel %vm167, %v922, 0.0
    %931 = vadd.xlane.f32.xlu0 %v930
    %v932 = vpop.xlane.xlu0 %931
    %v933 = vsel %vm167, %v923, 0.0
    %934 = vadd.xlane.f32.xlu0 %v933
    %v935 = vpop.xlane.xlu0 %934
    %v936 = vsel %vm167, %v924, 0.0
    %937 = vadd.xlane.f32.xlu0 %v936
    %v938 = vpop.xlane.xlu0 %937
    %v939 = vmul.f32 %v929, %v716
    %v940 = vmul.f32 %v932, %v716
    %v941 = vmul.f32 %v935, %v716
    %v942 = vmul.f32 %v938, %v716
    %v943 = vsub.f32 %v921, %v939
    %v944 = vsub.f32 %v922, %v940
    %v945 = vsub.f32 %v923, %v941
    %v946 = vsub.f32 %v924, %v942
    %v947 = vmul.f32 %v943, %v943
    %v948 = vmul.f32 %v944, %v944
    %v949 = vmul.f32 %v945, %v945
    %v950 = vmul.f32 %v946, %v946
    %v951 = vsel %vm167, %v947, 0.0
    %952 = vadd.xlane.f32.xlu0 %v951
    %v953 = vpop.xlane.xlu0 %952
    %v954 = vsel %vm167, %v948, 0.0
    %955 = vadd.xlane.f32.xlu0 %v954
    %v956 = vpop.xlane.xlu0 %955
    %v957 = vsel %vm167, %v949, 0.0
    %958 = vadd.xlane.f32.xlu0 %v957
    %v959 = vpop.xlane.xlu0 %958
    %v960 = vsel %vm167, %v950, 0.0
    %961 = vadd.xlane.f32.xlu0 %v960
    %v962 = vpop.xlane.xlu0 %961
    %v963 = vmul.f32 %v953, %v716
    %v964 = vmul.f32 %v956, %v716
    %v965 = vmul.f32 %v959, %v716
    %v966 = vmul.f32 %v962, %v716
    %v967 = vadd.f32 %v963, 1e-05
    %v968 = vadd.f32 %v964, 1e-05
    %v969 = vadd.f32 %v965, 1e-05
    %v970 = vadd.f32 %v966, 1e-05
    %v971 = vrsqrt.pop %v967
    %v972 = vmul.f32 %v971, %v967
    %v973 = vmul.f32 %v972, %v971
    %v974 = vmul.f32 0.5, %v973
    %v975 = vsub.f32 1.5, %v974
    %v976 = vmul.f32 %v971, %v975
    %vm977 = vweird.f32 %v967
    %vm978 = vweird.f32 %v971
    %vm979 = vmor %vm977, %vm978
    %v980 = vsel %vm979, %v971, %v976
    %v981 = vrsqrt.pop %v968
    %v982 = vmul.f32 %v981, %v968
    %v983 = vmul.f32 %v982, %v981
    %v984 = vmul.f32 0.5, %v983
    %v985 = vsub.f32 1.5, %v984
    %v986 = vmul.f32 %v981, %v985
    %vm987 = vweird.f32 %v968
    %vm988 = vweird.f32 %v981
    %vm989 = vmor %vm987, %vm988
    %v990 = vsel %vm989, %v981, %v986
    %v991 = vrsqrt.pop %v969
    %v992 = vmul.f32 %v991, %v969
    %v993 = vmul.f32 %v992, %v991
    %v994 = vmul.f32 0.5, %v993
    %v995 = vsub.f32 1.5, %v994
    %v996 = vmul.f32 %v991, %v995
    %vm997 = vweird.f32 %v969
    %vm998 = vweird.f32 %v991
    %vm999 = vmor %vm997, %vm998
    %v1000 = vsel %vm999, %v991, %v996
    %v1001 = vrsqrt.pop %v970
    %v1002 = vmul.f32 %v1001, %v970
    %v1003 = vmul.f32 %v1002, %v1001
    %v1004 = vmul.f32 0.5, %v1003
    %v1005 = vsub.f32 1.5, %v1004
    %v1006 = vmul.f32 %v1001, %v1005
    %vm1007 = vweird.f32 %v970
    %vm1008 = vweird.f32 %v1001
    %vm1009 = vmor %vm1007, %vm1008
    %v1010 = vsel %vm1009, %v1001, %v1006
    %v1011 = vmul.f32 %v943, %v980
    %v1012 = vmul.f32 %v944, %v990
    %v1013 = vmul.f32 %v945, %v1000
    %v1014 = vmul.f32 %v946, %v1010
    %v1016 = vperm.slane %v925, 0
    %v1018 = vmul.f32 %v1011, %v1016
    %v1019 = vmul.f32 %v1012, %v1016
    %v1020 = vmul.f32 %v1013, %v1016
    %v1021 = vmul.f32 %v1014, %v1016
    %v1023 = vperm.slane %v926, 0
    %v1025 = vadd.f32 %v1018, %v1023
    %v1026 = vadd.f32 %v1019, %v1023
    %v1027 = vadd.f32 %v1020, %v1023
    %v1028 = vadd.f32 %v1021, %v1023
    %v1029 = vpack.c.bf16 %v1026, %v1025
    %v1030 = vpack.c.bf16 %v1028, %v1027
    %s1031 = scalar_lea.vmem %s6, 16
    %v1032 = vld [vmem:[%s1031] sm:$0xf]
    %v1033 = vld [vmem:[%s1031 + $0x4] sm:$0xf]
    %v1034 = vld [vmem:[%s1031 + $0x8] sm:$0xf]
    %v1035 = vld [vmem:[%s1031 + $0xc] sm:$0xf]
    %s1036 = scalar_lea.vmem %s7, 1
    %v1037 = vld [vmem:[%s1036] sm:$0x1]
    %v1039 = vperm.slane %v1037, 0
    %v1045 = vunpack.c.l.b16 %v1032
    %v1046 = vunpack.c.l.b16 %v1033
    %v1047 = vunpack.c.l.b16 %v1034
    %v1048 = vunpack.c.l.b16 %v1035
    %v1049 = vpack.c.b16 %v1046, %v1045
    %v1050 = vpack.c.b16 %v1048, %v1047
    %v1054 = vsel %vm167, %v1029, 0
    %v1057 = vsel %vm167, %v1030, 0
    %1059 = vmatpush.bf16.msra.mxu0 0
    %1060 = vmatpush.bf16.msra.mxu0 0
    %1061 = vmatpush.bf16.msra.mxu0 0
    %1062 = vmatpush.bf16.msra.mxu0 0
    %1063 = vmatpush.bf16.msra.mxu0 0
    %1064 = vmatpush.bf16.msra.mxu0 0
    %1065 = vmatpush.bf16.msra.mxu0 %v1050
    %1066 = vmatpush.bf16.msra.mxu0 %v1049
    %1067 = vmatmul.bf16.gmra.mxu0 %v1054
    %v1068 = vpop.f32.mrf.mxu0
    %v1069 = vadd.f32 %v1039, %v1068
    %v1070 = vpop.f32.mrf.mxu0
    %v1071 = vadd.f32 %v1039, %v1070
    %1072 = vmatmul.bf16.gmra.mxu0 %v1057
    %v1073 = vpop.f32.mrf.mxu0
    %v1074 = vadd.f32 %v1039, %v1073
    %v1075 = vpop.f32.mrf.mxu0
    %v1076 = vadd.f32 %v1039, %v1075
    %1077 = vdwg.mxu0
    %v1078 = vpack.c.bf16 %v1069, %v1069
    %v1079 = vpack.c.bf16 %v1071, %v1071
    %v1080 = vpack.c.bf16 %v1074, %v1074
    %v1081 = vpack.c.bf16 %v1076, %v1076
    %v1086 = vunpack.c.l.b16 %v1078
    %v1087 = vunpack.c.l.b16 %v1079
    %v1088 = vunpack.c.l.b16 %v1080
    %v1089 = vunpack.c.l.b16 %v1081
    %v1090 = vpack.c.b16 %v1087, %v1086
    %v1091 = vpack.c.b16 %v1089, %v1088
    %v1094 = vunpack.c.l.bf16 %v1090
    %v1095 = vunpack.c.h.bf16 %v1090
    %v1096 = vunpack.c.l.bf16 %v1091
    %v1097 = vunpack.c.h.bf16 %v1091
    %v1098 = vmul.f32 %v1094, %v230
    %v1099 = vmul.f32 %v1095, %v232
    %v1100 = vmul.f32 %v1094, %v234
    %v1101 = vmul.f32 %v1095, %v236
    %v1102 = vmul.f32 %v1094, %v238
    %v1103 = vmul.f32 %v1095, %v240
    %v1104 = vmul.f32 %v1094, %v242
    %v1105 = vmul.f32 %v1095, %v244
    %v1106 = vmul.f32 %v1096, %v230
    %v1107 = vmul.f32 %v1097, %v232
    %v1108 = vmul.f32 %v1096, %v234
    %v1109 = vmul.f32 %v1097, %v236
    %v1110 = vmul.f32 %v1096, %v238
    %v1111 = vmul.f32 %v1097, %v240
    %v1112 = vmul.f32 %v1096, %v242
    %v1113 = vmul.f32 %v1097, %v244
    %v1114 = vpack.c.bf16 %v1098, %v1098
    %v1115 = vpack.c.bf16 %v1099, %v1099
    %v1116 = vpack.c.bf16 %v1100, %v1100
    %v1117 = vpack.c.bf16 %v1101, %v1101
    %v1118 = vpack.c.bf16 %v1102, %v1102
    %v1119 = vpack.c.bf16 %v1103, %v1103
    %v1120 = vpack.c.bf16 %v1104, %v1104
    %v1121 = vpack.c.bf16 %v1105, %v1105
    %v1122 = vpack.c.bf16 %v1106, %v1106
    %v1123 = vpack.c.bf16 %v1107, %v1107
    %v1124 = vpack.c.bf16 %v1108, %v1108
    %v1125 = vpack.c.bf16 %v1109, %v1109
    %v1126 = vpack.c.bf16 %v1110, %v1110
    %v1127 = vpack.c.bf16 %v1111, %v1111
    %v1128 = vpack.c.bf16 %v1112, %v1112
    %v1129 = vpack.c.bf16 %v1113, %v1113
    %v1130 = vmul.f32 %v1094, %v286
    %v1131 = vmul.f32 %v1095, %v288
    %v1132 = vmul.f32 %v1094, %v290
    %v1133 = vmul.f32 %v1095, %v292
    %v1134 = vmul.f32 %v1094, %v294
    %v1135 = vmul.f32 %v1095, %v296
    %v1136 = vmul.f32 %v1094, %v298
    %v1137 = vmul.f32 %v1095, %v300
    %v1138 = vmul.f32 %v1096, %v286
    %v1139 = vmul.f32 %v1097, %v288
    %v1140 = vmul.f32 %v1096, %v290
    %v1141 = vmul.f32 %v1097, %v292
    %v1142 = vmul.f32 %v1096, %v294
    %v1143 = vmul.f32 %v1097, %v296
    %v1144 = vmul.f32 %v1096, %v298
    %v1145 = vmul.f32 %v1097, %v300
    %v1146 = vpack.c.bf16 %v1130, %v1130
    %v1147 = vpack.c.bf16 %v1131, %v1131
    %v1148 = vpack.c.bf16 %v1132, %v1132
    %v1149 = vpack.c.bf16 %v1133, %v1133
    %v1150 = vpack.c.bf16 %v1134, %v1134
    %v1151 = vpack.c.bf16 %v1135, %v1135
    %v1152 = vpack.c.bf16 %v1136, %v1136
    %v1153 = vpack.c.bf16 %v1137, %v1137
    %v1154 = vpack.c.bf16 %v1138, %v1138
    %v1155 = vpack.c.bf16 %v1139, %v1139
    %v1156 = vpack.c.bf16 %v1140, %v1140
    %v1157 = vpack.c.bf16 %v1141, %v1141
    %v1158 = vpack.c.bf16 %v1142, %v1142
    %v1159 = vpack.c.bf16 %v1143, %v1143
    %v1160 = vpack.c.bf16 %v1144, %v1144
    %v1161 = vpack.c.bf16 %v1145, %v1145
    %v1170 = vunpack.c.l.b16 %v1114
    %v1171 = vunpack.c.l.b16 %v1115
    %v1172 = vunpack.c.l.b16 %v1116
    %v1173 = vunpack.c.l.b16 %v1117
    %v1174 = vunpack.c.l.b16 %v1118
    %v1175 = vunpack.c.l.b16 %v1119
    %v1176 = vunpack.c.l.b16 %v1120
    %v1177 = vunpack.c.l.b16 %v1121
    %v1178 = vpack.c.b16 %v1171, %v1170
    %v1179 = vpack.c.b16 %v1173, %v1172
    %v1180 = vpack.c.b16 %v1175, %v1174
    %v1181 = vpack.c.b16 %v1177, %v1176
    %1182 = vrot.lane.b32.xlu0 %v1178, 96
    %v1183 = vpop.permute.xlu0 %1182
    %1184 = vrot.lane.b32.xlu0 %v1179, 96
    %v1185 = vpop.permute.xlu0 %1184
    %1186 = vrot.lane.b32.xlu0 %v1180, 96
    %v1187 = vpop.permute.xlu0 %1186
    %1188 = vrot.lane.b32.xlu0 %v1181, 96
    %v1189 = vpop.permute.xlu0 %1188
    %v1191 = vsel %vm167, %v1090, 0
    %v1194 = vsel %vm167, %v1183, 0
    %v1197 = vsel %vm167, %v1185, 0
    %v1200 = vsel %vm167, %v1187, 0
    %v1203 = vsel %vm167, %v1189, 0
    %1205 = vmatpush.bf16.xpose.msra.mxu0 0
    %1206 = vmatpush.bf16.xpose.msra.mxu0 0
    %1207 = vmatpush.bf16.xpose.msra.mxu0 0
    %1208 = vmatpush.bf16.xpose.msra.mxu0 0
    %1209 = vmatpush.bf16.xpose.msra.mxu0 %v1203
    %1210 = vmatpush.bf16.xpose.msra.mxu0 %v1200
    %1211 = vmatpush.bf16.xpose.msra.mxu0 %v1197
    %1212 = vmatpush.bf16.xpose.msra.mxu0 %v1194
    %1213 = vmatmul.bf16.gmra.mxu0 %v1191
    %v1214 = vpop.f32.mrf.mxu0
    %v1215 = vadd.f32 %v127, %v1214
    %v1216 = vpop.f32.mrf.mxu0
    %v1217 = vadd.f32 %v128, %v1216
    %1218 = vdwg.mxu0
    %v1227 = vunpack.c.l.b16 %v1122
    %v1228 = vunpack.c.l.b16 %v1123
    %v1229 = vunpack.c.l.b16 %v1124
    %v1230 = vunpack.c.l.b16 %v1125
    %v1231 = vunpack.c.l.b16 %v1126
    %v1232 = vunpack.c.l.b16 %v1127
    %v1233 = vunpack.c.l.b16 %v1128
    %v1234 = vunpack.c.l.b16 %v1129
    %v1235 = vpack.c.b16 %v1228, %v1227
    %v1236 = vpack.c.b16 %v1230, %v1229
    %v1237 = vpack.c.b16 %v1232, %v1231
    %v1238 = vpack.c.b16 %v1234, %v1233
    %1239 = vrot.lane.b32.xlu0 %v1235, 96
    %v1240 = vpop.permute.xlu0 %1239
    %1241 = vrot.lane.b32.xlu0 %v1236, 96
    %v1242 = vpop.permute.xlu0 %1241
    %1243 = vrot.lane.b32.xlu0 %v1237, 96
    %v1244 = vpop.permute.xlu0 %1243
    %1245 = vrot.lane.b32.xlu0 %v1238, 96
    %v1246 = vpop.permute.xlu0 %1245
    %v1248 = vsel %vm167, %v1091, 0
    %v1251 = vsel %vm167, %v1240, 0
    %v1254 = vsel %vm167, %v1242, 0
    %v1257 = vsel %vm167, %v1244, 0
    %v1260 = vsel %vm167, %v1246, 0
    %1262 = vmatpush.bf16.xpose.msra.mxu0 0
    %1263 = vmatpush.bf16.xpose.msra.mxu0 0
    %1264 = vmatpush.bf16.xpose.msra.mxu0 0
    %1265 = vmatpush.bf16.xpose.msra.mxu0 0
    %1266 = vmatpush.bf16.xpose.msra.mxu0 %v1260
    %1267 = vmatpush.bf16.xpose.msra.mxu0 %v1257
    %1268 = vmatpush.bf16.xpose.msra.mxu0 %v1254
    %1269 = vmatpush.bf16.xpose.msra.mxu0 %v1251
    %1270 = vmatmul.bf16.gmra.mxu0 %v1248
    %v1271 = vpop.f32.mrf.mxu0
    %v1272 = vadd.f32 %v127, %v1271
    %v1273 = vpop.f32.mrf.mxu0
    %v1274 = vadd.f32 %v128, %v1273
    %1275 = vdwg.mxu0
    %v1276 = vsel %vm455, %v1215, -inf
    %1277 = vmax.xlane.f32.xlu0 %v1276
    %v1278 = vpop.xlane.xlu0 %1277
    %v1279 = vsel %vm455, %v1217, -inf
    %1280 = vmax.xlane.f32.xlu0 %v1279
    %v1281 = vpop.xlane.xlu0 %1280
    %v1282 = vsel %vm455, %v1272, -inf
    %1283 = vmax.xlane.f32.xlu0 %v1282
    %v1284 = vpop.xlane.xlu0 %1283
    %v1285 = vsel %vm455, %v1274, -inf
    %1286 = vmax.xlane.f32.xlu0 %v1285
    %v1287 = vpop.xlane.xlu0 %1286
    %v1288 = vsub.f32 %v1215, %v1278
    %v1289 = vsub.f32 %v1217, %v1281
    %v1290 = vsub.f32 %v1272, %v1284
    %v1291 = vsub.f32 %v1274, %v1287
    %v1292 = vmul.f32 %v1288, 1.442695
    %v1293 = vpow.pop %v1292
    %v1294 = vmul.f32 %v1289, 1.442695
    %v1295 = vpow.pop %v1294
    %v1296 = vmul.f32 %v1290, 1.442695
    %v1297 = vpow.pop %v1296
    %v1298 = vmul.f32 %v1291, 1.442695
    %v1299 = vpow.pop %v1298
    %v1301 = vsel %vm455, %v1293, 0
    %v1304 = vsel %vm455, %v1295, 0
    %v1307 = vsel %vm455, %v1297, 0
    %v1310 = vsel %vm455, %v1299, 0
    %1312 = vmatpush.msra.mxu0 0.0
    %1313 = vmatpush.msra.mxu0 0.0
    %1314 = vmatpush.msra.mxu0 0.0
    %1315 = vmatpush.msra.mxu0 0.0
    %1316 = vmatpush.msra.mxu0 0.0
    %1317 = vmatpush.msra.mxu0 0.0
    %1318 = vmatpush.msra.mxu0 0.0
    %1319 = vmatpush.msra.mxu0 0.0
    %1320 = vmatpush.msra.mxu0 %v144
    %1321 = vmatpush.msra.mxu0 %v143
    %1322 = vmatpush.msra.mxu0 %v142
    %1323 = vmatpush.msra.mxu0 %v141
    %1324 = vmatpush.msra.mxu0 %v140
    %1325 = vmatpush.msra.mxu0 %v139
    %1326 = vmatpush.msra.mxu0 %v138
    %1327 = vmatpush.msra.mxu0 %v137
    %1328 = vmatmul.f32.gmra.mxu0 %v1301
    %v1329 = vpop.f32.mrf.mxu0
    %v1330 = vadd.f32 0.0, %v1329
    %1331 = vmatmul.f32.gmra.mxu0 %v1304
    %v1332 = vpop.f32.mrf.mxu0
    %v1333 = vadd.f32 0.0, %v1332
    %1334 = vmatmul.f32.gmra.mxu0 %v1307
    %v1335 = vpop.f32.mrf.mxu0
    %v1336 = vadd.f32 0.0, %v1335
    %1337 = vmatmul.f32.gmra.mxu0 %v1310
    %v1338 = vpop.f32.mrf.mxu0
    %v1339 = vadd.f32 0.0, %v1338
    %1340 = vdwg.mxu0
    %v1341 = vrcp.pop %v1330
    %v1342 = vrcp.pop %v1333
    %v1343 = vrcp.pop %v1336
    %v1344 = vrcp.pop %v1339
    %v1345 = vmul.f32 %v1293, %v1341
    %v1346 = vmul.f32 %v1295, %v1342
    %v1347 = vmul.f32 %v1297, %v1343
    %v1348 = vmul.f32 %v1299, %v1344
    %v1349 = vpack.c.bf16 %v1345, %v1345
    %v1350 = vpack.c.bf16 %v1346, %v1346
    %v1351 = vpack.c.bf16 %v1347, %v1347
    %v1352 = vpack.c.bf16 %v1348, %v1348
    %v1355 = vunpack.c.l.b16 %v1349
    %v1356 = vunpack.c.l.b16 %v1350
    %v1357 = vpack.c.b16 %v1356, %v1355
    %v1366 = vunpack.c.l.b16 %v1146
    %v1367 = vunpack.c.l.b16 %v1147
    %v1368 = vunpack.c.l.b16 %v1148
    %v1369 = vunpack.c.l.b16 %v1149
    %v1370 = vunpack.c.l.b16 %v1150
    %v1371 = vunpack.c.l.b16 %v1151
    %v1372 = vunpack.c.l.b16 %v1152
    %v1373 = vunpack.c.l.b16 %v1153
    %v1374 = vpack.c.b16 %v1367, %v1366
    %v1375 = vpack.c.b16 %v1369, %v1368
    %v1376 = vpack.c.b16 %v1371, %v1370
    %v1377 = vpack.c.b16 %v1373, %v1372
    %1378 = vrot.lane.b32.xlu0 %v1374, 64
    %v1379 = vpop.permute.xlu0 %1378
    %1380 = vrot.lane.b32.xlu0 %v1375, 64
    %v1381 = vpop.permute.xlu0 %1380
    %1382 = vrot.lane.b32.xlu0 %v1376, 64
    %v1383 = vpop.permute.xlu0 %1382
    %1384 = vrot.lane.b32.xlu0 %v1377, 64
    %v1385 = vpop.permute.xlu0 %1384
    %v1391 = vsel %vm455, %v1357, 0
    %1393 = vmatpush.bf16.msra.mxu0 0
    %1394 = vmatpush.bf16.msra.mxu0 0
    %1395 = vmatpush.bf16.msra.mxu0 0
    %1396 = vmatpush.bf16.msra.mxu0 0
    %1397 = vmatpush.bf16.msra.mxu0 %v1385
    %1398 = vmatpush.bf16.msra.mxu0 %v1383
    %1399 = vmatpush.bf16.msra.mxu0 %v1381
    %1400 = vmatpush.bf16.msra.mxu0 %v1379
    %1401 = vmatmul.bf16.gmra.mxu0 %v1391
    %v1402 = vpop.f32.mrf.mxu0
    %v1403 = vadd.f32 0.0, %v1402
    %v1404 = vpop.f32.mrf.mxu0
    %v1405 = vadd.f32 0.0, %v1404
    %1406 = vdwg.mxu0
    %v1409 = vunpack.c.l.b16 %v1351
    %v1410 = vunpack.c.l.b16 %v1352
    %v1411 = vpack.c.b16 %v1410, %v1409
    %v1420 = vunpack.c.l.b16 %v1154
    %v1421 = vunpack.c.l.b16 %v1155
    %v1422 = vunpack.c.l.b16 %v1156
    %v1423 = vunpack.c.l.b16 %v1157
    %v1424 = vunpack.c.l.b16 %v1158
    %v1425 = vunpack.c.l.b16 %v1159
    %v1426 = vunpack.c.l.b16 %v1160
    %v1427 = vunpack.c.l.b16 %v1161
    %v1428 = vpack.c.b16 %v1421, %v1420
    %v1429 = vpack.c.b16 %v1423, %v1422
    %v1430 = vpack.c.b16 %v1425, %v1424
    %v1431 = vpack.c.b16 %v1427, %v1426
    %1432 = vrot.lane.b32.xlu0 %v1428, 64
    %v1433 = vpop.permute.xlu0 %1432
    %1434 = vrot.lane.b32.xlu0 %v1429, 64
    %v1435 = vpop.permute.xlu0 %1434
    %1436 = vrot.lane.b32.xlu0 %v1430, 64
    %v1437 = vpop.permute.xlu0 %1436
    %1438 = vrot.lane.b32.xlu0 %v1431, 64
    %v1439 = vpop.permute.xlu0 %1438
    %v1445 = vsel %vm455, %v1411, 0
    %1447 = vmatpush.bf16.msra.mxu0 0
    %1448 = vmatpush.bf16.msra.mxu0 0
    %1449 = vmatpush.bf16.msra.mxu0 0
    %1450 = vmatpush.bf16.msra.mxu0 0
    %1451 = vmatpush.bf16.msra.mxu0 %v1439
    %1452 = vmatpush.bf16.msra.mxu0 %v1437
    %1453 = vmatpush.bf16.msra.mxu0 %v1435
    %1454 = vmatpush.bf16.msra.mxu0 %v1433
    %1455 = vmatmul.bf16.gmra.mxu0 %v1445
    %v1456 = vpop.f32.mrf.mxu0
    %v1457 = vadd.f32 0.0, %v1456
    %v1458 = vpop.f32.mrf.mxu0
    %v1459 = vadd.f32 0.0, %v1458
    %1460 = vdwg.mxu0
    %v1461 = vpack.c.bf16 %v1405, %v1403
    %v1462 = vpack.c.bf16 %v1459, %v1457
    %s1463 = scalar_lea.vmem %s8, 16
    %v1464 = vld [vmem:[%s1463] sm:$0xf]
    %v1465 = vld [vmem:[%s1463 + $0x4] sm:$0xf]
    %v1466 = vld [vmem:[%s1463 + $0x8] sm:$0xf]
    %v1467 = vld [vmem:[%s1463 + $0xc] sm:$0xf]
    %v1472 = vunpack.c.l.b16 %v1464
    %v1473 = vunpack.c.l.b16 %v1465
    %v1474 = vunpack.c.l.b16 %v1466
    %v1475 = vunpack.c.l.b16 %v1467
    %v1476 = vpack.c.b16 %v1473, %v1472
    %v1477 = vpack.c.b16 %v1475, %v1474
    %v1481 = vsel %vm167, %v1461, 0
    %v1484 = vsel %vm167, %v1462, 0
    %1486 = vmatpush.bf16.msra.mxu0 0
    %1487 = vmatpush.bf16.msra.mxu0 0
    %1488 = vmatpush.bf16.msra.mxu0 0
    %1489 = vmatpush.bf16.msra.mxu0 0
    %1490 = vmatpush.bf16.msra.mxu0 0
    %1491 = vmatpush.bf16.msra.mxu0 0
    %1492 = vmatpush.bf16.msra.mxu0 %v1477
    %1493 = vmatpush.bf16.msra.mxu0 %v1476
    %1494 = vmatmul.bf16.gmra.mxu0 %v1481
    %v1495 = vpop.f32.mrf.mxu0
    %v1496 = vadd.f32 0.0, %v1495
    %v1497 = vpop.f32.mrf.mxu0
    %v1498 = vadd.f32 0.0, %v1497
    %1499 = vmatmul.bf16.gmra.mxu0 %v1484
    %v1500 = vpop.f32.mrf.mxu0
    %v1501 = vadd.f32 0.0, %v1500
    %v1502 = vpop.f32.mrf.mxu0
    %v1503 = vadd.f32 0.0, %v1502
    %1504 = vdwg.mxu0
    %v1505 = vadd.f32 %v1025, %v1496
    %v1506 = vadd.f32 %v1026, %v1498
    %v1507 = vadd.f32 %v1027, %v1501
    %v1508 = vadd.f32 %v1028, %v1503
    %s1509 = scalar_lea.vmem %s9, 1
    %v1510 = vld [vmem:[%s1509] sm:$0x1]
    %v1512 = vperm.slane %v1510, 0
    %v1514 = vadd.f32 %v1505, %v1512
    %v1515 = vadd.f32 %v1506, %v1512
    %v1516 = vadd.f32 %v1507, %v1512
    %v1517 = vadd.f32 %v1508, %v1512
    %s1518 = scalar_lea.vmem %s14, 1
    %v1519 = vld [vmem:[%s1518] sm:$0x1]
    %s1520 = scalar_lea.vmem %s15, 1
    %v1521 = vld [vmem:[%s1520] sm:$0x1]
    %v1522 = vsel %vm167, %v1514, 0.0
    %1523 = vadd.xlane.f32.xlu0 %v1522
    %v1524 = vpop.xlane.xlu0 %1523
    %v1525 = vsel %vm167, %v1515, 0.0
    %1526 = vadd.xlane.f32.xlu0 %v1525
    %v1527 = vpop.xlane.xlu0 %1526
    %v1528 = vsel %vm167, %v1516, 0.0
    %1529 = vadd.xlane.f32.xlu0 %v1528
    %v1530 = vpop.xlane.xlu0 %1529
    %v1531 = vsel %vm167, %v1517, 0.0
    %1532 = vadd.xlane.f32.xlu0 %v1531
    %v1533 = vpop.xlane.xlu0 %1532
    %v1534 = vmul.f32 %v1524, %v716
    %v1535 = vmul.f32 %v1527, %v716
    %v1536 = vmul.f32 %v1530, %v716
    %v1537 = vmul.f32 %v1533, %v716
    %v1538 = vsub.f32 %v1514, %v1534
    %v1539 = vsub.f32 %v1515, %v1535
    %v1540 = vsub.f32 %v1516, %v1536
    %v1541 = vsub.f32 %v1517, %v1537
    %v1542 = vmul.f32 %v1538, %v1538
    %v1543 = vmul.f32 %v1539, %v1539
    %v1544 = vmul.f32 %v1540, %v1540
    %v1545 = vmul.f32 %v1541, %v1541
    %v1546 = vsel %vm167, %v1542, 0.0
    %1547 = vadd.xlane.f32.xlu0 %v1546
    %v1548 = vpop.xlane.xlu0 %1547
    %v1549 = vsel %vm167, %v1543, 0.0
    %1550 = vadd.xlane.f32.xlu0 %v1549
    %v1551 = vpop.xlane.xlu0 %1550
    %v1552 = vsel %vm167, %v1544, 0.0
    %1553 = vadd.xlane.f32.xlu0 %v1552
    %v1554 = vpop.xlane.xlu0 %1553
    %v1555 = vsel %vm167, %v1545, 0.0
    %1556 = vadd.xlane.f32.xlu0 %v1555
    %v1557 = vpop.xlane.xlu0 %1556
    %v1558 = vmul.f32 %v1548, %v716
    %v1559 = vmul.f32 %v1551, %v716
    %v1560 = vmul.f32 %v1554, %v716
    %v1561 = vmul.f32 %v1557, %v716
    %v1562 = vadd.f32 %v1558, 1e-05
    %v1563 = vadd.f32 %v1559, 1e-05
    %v1564 = vadd.f32 %v1560, 1e-05
    %v1565 = vadd.f32 %v1561, 1e-05
    %v1566 = vrsqrt.pop %v1562
    %v1567 = vmul.f32 %v1566, %v1562
    %v1568 = vmul.f32 %v1567, %v1566
    %v1569 = vmul.f32 0.5, %v1568
    %v1570 = vsub.f32 1.5, %v1569
    %v1571 = vmul.f32 %v1566, %v1570
    %vm1572 = vweird.f32 %v1562
    %vm1573 = vweird.f32 %v1566
    %vm1574 = vmor %vm1572, %vm1573
    %v1575 = vsel %vm1574, %v1566, %v1571
    %v1576 = vrsqrt.pop %v1563
    %v1577 = vmul.f32 %v1576, %v1563
    %v1578 = vmul.f32 %v1577, %v1576
    %v1579 = vmul.f32 0.5, %v1578
    %v1580 = vsub.f32 1.5, %v1579
    %v1581 = vmul.f32 %v1576, %v1580
    %vm1582 = vweird.f32 %v1563
    %vm1583 = vweird.f32 %v1576
    %vm1584 = vmor %vm1582, %vm1583
    %v1585 = vsel %vm1584, %v1576, %v1581
    %v1586 = vrsqrt.pop %v1564
    %v1587 = vmul.f32 %v1586, %v1564
    %v1588 = vmul.f32 %v1587, %v1586
    %v1589 = vmul.f32 0.5, %v1588
    %v1590 = vsub.f32 1.5, %v1589
    %v1591 = vmul.f32 %v1586, %v1590
    %vm1592 = vweird.f32 %v1564
    %vm1593 = vweird.f32 %v1586
    %vm1594 = vmor %vm1592, %vm1593
    %v1595 = vsel %vm1594, %v1586, %v1591
    %v1596 = vrsqrt.pop %v1565
    %v1597 = vmul.f32 %v1596, %v1565
    %v1598 = vmul.f32 %v1597, %v1596
    %v1599 = vmul.f32 0.5, %v1598
    %v1600 = vsub.f32 1.5, %v1599
    %v1601 = vmul.f32 %v1596, %v1600
    %vm1602 = vweird.f32 %v1565
    %vm1603 = vweird.f32 %v1596
    %vm1604 = vmor %vm1602, %vm1603
    %v1605 = vsel %vm1604, %v1596, %v1601
    %v1606 = vmul.f32 %v1538, %v1575
    %v1607 = vmul.f32 %v1539, %v1585
    %v1608 = vmul.f32 %v1540, %v1595
    %v1609 = vmul.f32 %v1541, %v1605
    %v1611 = vperm.slane %v1519, 0
    %v1613 = vmul.f32 %v1606, %v1611
    %v1614 = vmul.f32 %v1607, %v1611
    %v1615 = vmul.f32 %v1608, %v1611
    %v1616 = vmul.f32 %v1609, %v1611
    %v1618 = vperm.slane %v1521, 0
    %v1620 = vadd.f32 %v1613, %v1618
    %v1621 = vadd.f32 %v1614, %v1618
    %v1622 = vadd.f32 %v1615, %v1618
    %v1623 = vadd.f32 %v1616, %v1618
    %v1624 = vpack.c.bf16 %v1621, %v1620
    %v1625 = vpack.c.bf16 %v1623, %v1622
    %s1626 = scalar_lea.vmem [#allocation2], 16
    %v1627 = vld [vmem:[%s1626] sm:$0xf]
    %v1628 = vld [vmem:[%s1626 + $0x4] sm:$0xf]
    %v1629 = vld [vmem:[%s1626 + $0x8] sm:$0xf]
    %v1630 = vld [vmem:[%s1626 + $0xc] sm:$0xf]
    %s1631 = scalar_lea.vmem %s11, 1
    %v1632 = vld [vmem:[%s1631] sm:$0x1]
    %v1634 = vperm.slane %v1632, 0
    %v1640 = vunpack.c.l.b16 %v1627
    %v1641 = vunpack.c.l.b16 %v1628
    %v1642 = vunpack.c.l.b16 %v1629
    %v1643 = vunpack.c.l.b16 %v1630
    %v1644 = vpack.c.b16 %v1641, %v1640
    %v1645 = vpack.c.b16 %v1643, %v1642
    %v1649 = vsel %vm167, %v1624, 0
    %v1652 = vsel %vm167, %v1625, 0
    %1654 = vmatpush.bf16.msra.mxu0 0
    %1655 = vmatpush.bf16.msra.mxu0 0
    %1656 = vmatpush.bf16.msra.mxu0 0
    %1657 = vmatpush.bf16.msra.mxu0 0
    %1658 = vmatpush.bf16.msra.mxu0 0
    %1659 = vmatpush.bf16.msra.mxu0 0
    %1660 = vmatpush.bf16.msra.mxu0 %v1645
    %1661 = vmatpush.bf16.msra.mxu0 %v1644
    %1662 = vmatmul.bf16.gmra.mxu0 %v1649
    %v1663 = vpop.f32.mrf.mxu0
    %v1664 = vadd.f32 %v1634, %v1663
    %v1665 = vpop.f32.mrf.mxu0
    %v1666 = vadd.f32 %v1634, %v1665
    %1667 = vmatmul.bf16.gmra.mxu0 %v1652
    %v1668 = vpop.f32.mrf.mxu0
    %v1669 = vadd.f32 %v1634, %v1668
    %v1670 = vpop.f32.mrf.mxu0
    %v1671 = vadd.f32 %v1634, %v1670
    %1672 = vdwg.mxu0
    %v1673 = vmax.f32 %v1664, 0.0
    %v1674 = vmax.f32 %v1666, 0.0
    %v1675 = vmax.f32 %v1669, 0.0
    %v1676 = vmax.f32 %v1671, 0.0
    %v1677 = vpack.c.bf16 %v1674, %v1673
    %v1678 = vpack.c.bf16 %v1676, %v1675
    %s1679 = scalar_lea.vmem %s12, 32
    %v1680 = vld [vmem:[%s1679] sm:$0xf]
    %v1681 = vld [vmem:[%s1679 + $0x4] sm:$0xf]
    %v1682 = vld [vmem:[%s1679 + $0x8] sm:$0xf]
    %v1683 = vld [vmem:[%s1679 + $0xc] sm:$0xf]
    %v1684 = vld [vmem:[%s1679 + $0x10] sm:$0xf]
    %v1685 = vld [vmem:[%s1679 + $0x14] sm:$0xf]
    %v1686 = vld [vmem:[%s1679 + $0x18] sm:$0xf]
    %v1687 = vld [vmem:[%s1679 + $0x1c] sm:$0xf]
    %s1688 = scalar_lea.vmem %s13, 1
    %v1689 = vld [vmem:[%s1688] sm:$0x1]
    %v1691 = vperm.slane %v1689, 0
    %v1701 = vunpack.c.l.b16 %v1680
    %v1702 = vunpack.c.l.b16 %v1681
    %v1703 = vunpack.c.l.b16 %v1682
    %v1704 = vunpack.c.l.b16 %v1683
    %v1705 = vunpack.c.l.b16 %v1684
    %v1706 = vunpack.c.l.b16 %v1685
    %v1707 = vunpack.c.l.b16 %v1686
    %v1708 = vunpack.c.l.b16 %v1687
    %v1709 = vpack.c.b16 %v1702, %v1701
    %v1710 = vpack.c.b16 %v1704, %v1703
    %v1711 = vpack.c.b16 %v1706, %v1705
    %v1712 = vpack.c.b16 %v1708, %v1707
    %v1718 = vsel %vm455, %v1677, 0
    %v1721 = vsel %vm455, %v1678, 0
    %1723 = vmatpush.bf16.msra.mxu0 0
    %1724 = vmatpush.bf16.msra.mxu0 0
    %1725 = vmatpush.bf16.msra.mxu0 0
    %1726 = vmatpush.bf16.msra.mxu0 0
    %1727 = vmatpush.bf16.msra.mxu0 %v1712
    %1728 = vmatpush.bf16.msra.mxu0 %v1711
    %1729 = vmatpush.bf16.msra.mxu0 %v1710
    %1730 = vmatpush.bf16.msra.mxu0 %v1709
    %1731 = vmatmul.bf16.gmra.mxu0 %v1718
    %v1732 = vpop.f32.mrf.mxu0
    %v1733 = vadd.f32 %v1691, %v1732
    %v1734 = vpop.f32.mrf.mxu0
    %v1735 = vadd.f32 %v1691, %v1734
    %1736 = vmatmul.bf16.gmra.mxu0 %v1721
    %v1737 = vpop.f32.mrf.mxu0
    %v1738 = vadd.f32 %v1691, %v1737
    %v1739 = vpop.f32.mrf.mxu0
    %v1740 = vadd.f32 %v1691, %v1739
    %1741 = vdwg.mxu0
    %v1742 = vadd.f32 %v1620, %v1733
    %v1743 = vadd.f32 %v1621, %v1735
    %v1744 = vadd.f32 %v1622, %v1738
    %v1745 = vadd.f32 %v1623, %v1740
    %s1746 = scalar_lea.vmem %s16, 1
    %v1747 = vld [vmem:[%s1746] sm:$0x1]
    %s1748 = scalar_lea.vmem %s17, 1
    %v1749 = vld [vmem:[%s1748] sm:$0x1]
    %v1750 = vsel %vm167, %v1742, 0.0
    %1751 = vadd.xlane.f32.xlu0 %v1750
    %v1752 = vpop.xlane.xlu0 %1751
    %v1753 = vsel %vm167, %v1743, 0.0
    %1754 = vadd.xlane.f32.xlu0 %v1753
    %v1755 = vpop.xlane.xlu0 %1754
    %v1756 = vsel %vm167, %v1744, 0.0
    %1757 = vadd.xlane.f32.xlu0 %v1756
    %v1758 = vpop.xlane.xlu0 %1757
    %v1759 = vsel %vm167, %v1745, 0.0
    %1760 = vadd.xlane.f32.xlu0 %v1759
    %v1761 = vpop.xlane.xlu0 %1760
    %v1762 = vmul.f32 %v1752, %v716
    %v1763 = vmul.f32 %v1755, %v716
    %v1764 = vmul.f32 %v1758, %v716
    %v1765 = vmul.f32 %v1761, %v716
    %v1766 = vsub.f32 %v1742, %v1762
    %v1767 = vsub.f32 %v1743, %v1763
    %v1768 = vsub.f32 %v1744, %v1764
    %v1769 = vsub.f32 %v1745, %v1765
    %v1770 = vmul.f32 %v1766, %v1766
    %v1771 = vmul.f32 %v1767, %v1767
    %v1772 = vmul.f32 %v1768, %v1768
    %v1773 = vmul.f32 %v1769, %v1769
    %v1774 = vsel %vm167, %v1770, 0.0
    %1775 = vadd.xlane.f32.xlu0 %v1774
    %v1776 = vpop.xlane.xlu0 %1775
    %v1777 = vsel %vm167, %v1771, 0.0
    %1778 = vadd.xlane.f32.xlu0 %v1777
    %v1779 = vpop.xlane.xlu0 %1778
    %v1780 = vsel %vm167, %v1772, 0.0
    %1781 = vadd.xlane.f32.xlu0 %v1780
    %v1782 = vpop.xlane.xlu0 %1781
    %v1783 = vsel %vm167, %v1773, 0.0
    %1784 = vadd.xlane.f32.xlu0 %v1783
    %v1785 = vpop.xlane.xlu0 %1784
    %v1786 = vmul.f32 %v1776, %v716
    %v1787 = vmul.f32 %v1779, %v716
    %v1788 = vmul.f32 %v1782, %v716
    %v1789 = vmul.f32 %v1785, %v716
    %v1790 = vadd.f32 %v1786, 1e-05
    %v1791 = vadd.f32 %v1787, 1e-05
    %v1792 = vadd.f32 %v1788, 1e-05
    %v1793 = vadd.f32 %v1789, 1e-05
    %v1794 = vrsqrt.pop %v1790
    %v1795 = vmul.f32 %v1794, %v1790
    %v1796 = vmul.f32 %v1795, %v1794
    %v1797 = vmul.f32 0.5, %v1796
    %v1798 = vsub.f32 1.5, %v1797
    %v1799 = vmul.f32 %v1794, %v1798
    %vm1800 = vweird.f32 %v1790
    %vm1801 = vweird.f32 %v1794
    %vm1802 = vmor %vm1800, %vm1801
    %v1803 = vsel %vm1802, %v1794, %v1799
    %v1804 = vrsqrt.pop %v1791
    %v1805 = vmul.f32 %v1804, %v1791
    %v1806 = vmul.f32 %v1805, %v1804
    %v1807 = vmul.f32 0.5, %v1806
    %v1808 = vsub.f32 1.5, %v1807
    %v1809 = vmul.f32 %v1804, %v1808
    %vm1810 = vweird.f32 %v1791
    %vm1811 = vweird.f32 %v1804
    %vm1812 = vmor %vm1810, %vm1811
    %v1813 = vsel %vm1812, %v1804, %v1809
    %v1814 = vrsqrt.pop %v1792
    %v1815 = vmul.f32 %v1814, %v1792
    %v1816 = vmul.f32 %v1815, %v1814
    %v1817 = vmul.f32 0.5, %v1816
    %v1818 = vsub.f32 1.5, %v1817
    %v1819 = vmul.f32 %v1814, %v1818
    %vm1820 = vweird.f32 %v1792
    %vm1821 = vweird.f32 %v1814
    %vm1822 = vmor %vm1820, %vm1821
    %v1823 = vsel %vm1822, %v1814, %v1819
    %v1824 = vrsqrt.pop %v1793
    %v1825 = vmul.f32 %v1824, %v1793
    %v1826 = vmul.f32 %v1825, %v1824
    %v1827 = vmul.f32 0.5, %v1826
    %v1828 = vsub.f32 1.5, %v1827
    %v1829 = vmul.f32 %v1824, %v1828
    %vm1830 = vweird.f32 %v1793
    %vm1831 = vweird.f32 %v1824
    %vm1832 = vmor %vm1830, %vm1831
    %v1833 = vsel %vm1832, %v1824, %v1829
    %v1834 = vmul.f32 %v1766, %v1803
    %v1835 = vmul.f32 %v1767, %v1813
    %v1836 = vmul.f32 %v1768, %v1823
    %v1837 = vmul.f32 %v1769, %v1833
    %v1839 = vperm.slane %v1747, 0
    %v1841 = vmul.f32 %v1834, %v1839
    %v1842 = vmul.f32 %v1835, %v1839
    %v1843 = vmul.f32 %v1836, %v1839
    %v1844 = vmul.f32 %v1837, %v1839
    %v1846 = vperm.slane %v1749, 0
    %v1848 = vadd.f32 %v1841, %v1846
    %v1849 = vadd.f32 %v1842, %v1846
    %v1850 = vadd.f32 %v1843, %v1846
    %v1851 = vadd.f32 %v1844, %v1846
    %v1852 = vpack.c.bf16 %v1848, %v1848
    %v1853 = vpack.c.bf16 %v1849, %v1849
    %v1854 = vpack.c.bf16 %v1850, %v1850
    %v1855 = vpack.c.bf16 %v1851, %v1851
    %vm1856 = vcmask 257024
    %1857 = vst.msk [vmem:[%s18] sm:$0xf] %vm1856, %v1852
    %1858 = vst.msk [vmem:[%s18 + $0x4] sm:$0xf] %vm1856, %v1853
    %1859 = vst.msk [vmem:[%s18 + $0x8] sm:$0xf] %vm1856, %v1854
    %1860 = vst.msk [vmem:[%s18 + $0xc] sm:$0xf] %vm1856, %v1855
    // Predicated region
    $region78: #{transformer_forward.1} parent=1 // pred_check
      _
    $region79: #{transformer_forward.1} parent=1 // pred_check_branch
      %1862 = sbr.rel (0) target = $region81
    $region80: #{transformer_forward.1} parent=1 // pred_region
      _
    $region81: #{transformer_forward.1} parent=1 // pred_fallthru
      _
    // Predicated region
    $region82: #{transformer_forward.1} parent=1 // pred_check
      _
    $region83: #{transformer_forward.1} parent=1 // pred_check_branch
      %1864 = sbr.rel (0) target = $region85
    $region84: #{transformer_forward.1} parent=1 // pred_region
      _
    $region85: #{transformer_forward.1} parent=1 // pred_fallthru
      _
    %1865 = vsyncpa [#allocation3], 1

</llo_original>
